<compile_context>
chip_gen: v7x
topology: tpu7x:2x2x1
jax: 0.10.0
libtpu: 0.0.40
codegen_flags: <defaults>
</compile_context>

<pallas_src>
import jax
import jax.numpy as jnp
from jax.experimental import pallas as pl
from jax.experimental.pallas import tpu as pltpu

LANE = 128


def _round_up(v, m):
    return ((v + m - 1) // m) * m


def _pretrain_kernel(a_ref, xwg_ref, bg_ref, w1_ref, b1_ref, w2_ref, b2_ref,
                     emb_ref, out_ref, acc_ref):
    k = pl.program_id(1)

    @pl.when(k == 0)
    def _init():
        # Fold the GNN bias into the accumulator init (no add in the hot loop).
        acc_ref[...] = jnp.broadcast_to(bg_ref[...], acc_ref.shape)

    # Dominant matmul: (TM, TK) @ (TK, H_PAD), f32 accumulated over the K axis.
    acc_ref[...] += jnp.dot(a_ref[...], xwg_ref[...],
                            preferred_element_type=jnp.float32)

    @pl.when(k == pl.num_programs(1) - 1)
    def _finalize():
        h = jnp.maximum(acc_ref[...], 0.0)            # GNN ReLU (f32 on the VPU)
        emb_ref[...] = h.astype(emb_ref.dtype)        # self.emb (bf16, lane-dense)
        m = jnp.dot(h.astype(jnp.bfloat16), w1_ref[...],
                    preferred_element_type=jnp.float32) + b1_ref[...]
        m = jnp.maximum(m, 0.0)
        out_ref[...] = jnp.dot(m.astype(jnp.bfloat16), w2_ref[...],
                               preferred_element_type=jnp.float32) + b2_ref[...]


def pretrain_forward(a_hat, x, wg, bg, w1, b1, w2, b2, *, tm=256, tk=512):
    n, f_in = x.shape
    hidden = wg.shape[1]
    out_dim = w2.shape[1]

    h_pad = _round_up(max(hidden, LANE), LANE)    # lane-dense hidden
    o_pad = _round_up(max(out_dim, LANE), LANE)   # lane-dense output

    # Clamp tile sizes to the (128-aligned) problem so tiny problems run as a
    # single block with everything VMEM-resident.
    n_align = _round_up(n, LANE)
    tm = min(tm, n_align)
    tk = min(tk, n_align)

    # Pad rows to a multiple of tm and columns to a multiple of tk
    # independently (fixes over-padding / dropped-tile hazards of max(tm,tk)).
    n_rows = _round_up(n, tm)
    n_cols = _round_up(n, tk)

    def pad2(arr, rows, cols, dtype):
        return jnp.pad(arr, ((0, rows - arr.shape[0]),
                             (0, cols - arr.shape[1]))).astype(dtype)

    bf16 = jnp.bfloat16
    hp = jax.lax.Precision.HIGHEST

    # Hoisted projection: XWg computed once (f32), cast to bf16 for the MXU.
    xwg = jnp.dot(x, wg, precision=hp)

    a_p = pad2(a_hat, n_rows, n_cols, bf16)
    xwg_p = pad2(xwg, n_cols, h_pad, bf16)
    w1_p = pad2(w1, h_pad, h_pad, bf16)
    w2_p = pad2(w2, h_pad, o_pad, bf16)
    bg_p = pad2(bg.reshape(1, -1), 1, h_pad, jnp.float32)
    b1_p = pad2(b1.reshape(1, -1), 1, h_pad, jnp.float32)
    b2_p = pad2(b2.reshape(1, -1), 1, o_pad, jnp.float32)

    grid = (n_rows // tm, n_cols // tk)

    # VMEM budget derived from the actual footprint (double-buffered tiles,
    # resident weights, accumulator), with 2x headroom, capped at 64 MiB so it
    # also fits v7x's smaller physical VMEM.
    vmem_est = (
        2 * tm * tk * 2 +                       # A_hat tile, double-buffered (bf16)
        2 * tk * h_pad * 2 +                    # XWg K-tile, double-buffered (bf16)
        2 * (h_pad * h_pad + h_pad * o_pad) * 2 +   # W1, W2 (bf16)
        2 * (2 * h_pad + o_pad) * 4 +           # biases (f32)
        2 * tm * h_pad * 2 +                    # emb tile writeback (bf16)
        2 * tm * o_pad * 4 +                    # out tile writeback (f32)
        tm * h_pad * 4                          # accumulator (f32)
    )
    vmem_limit = min(max(2 * vmem_est, 16 * 1024 * 1024), 64 * 1024 * 1024)

    emb_p, out_p = pl.pallas_call(
        _pretrain_kernel,
        out_shape=(
            jax.ShapeDtypeStruct((n_rows, h_pad), jnp.bfloat16),   # embedding
            jax.ShapeDtypeStruct((n_rows, o_pad), jnp.float32),    # mlp output
        ),
        grid_spec=pltpu.PrefetchScalarGridSpec(
            num_scalar_prefetch=0,
            grid=grid,
            in_specs=[
                pl.BlockSpec((tm, tk), lambda i, k: (i, k)),        # A_hat tile
                pl.BlockSpec((tk, h_pad), lambda i, k: (k, 0)),     # XWg K-tile
                pl.BlockSpec((1, h_pad), lambda i, k: (0, 0)),      # bg
                pl.BlockSpec((h_pad, h_pad), lambda i, k: (0, 0)),  # W1 (whole)
                pl.BlockSpec((1, h_pad), lambda i, k: (0, 0)),      # b1
                pl.BlockSpec((h_pad, o_pad), lambda i, k: (0, 0)),  # W2 (whole)
                pl.BlockSpec((1, o_pad), lambda i, k: (0, 0)),      # b2
            ],
            out_specs=[
                pl.BlockSpec((tm, h_pad), lambda i, k: (i, 0)),     # emb rows
                pl.BlockSpec((tm, o_pad), lambda i, k: (i, 0)),     # out rows
            ],
            scratch_shapes=[pltpu.VMEM((tm, h_pad), jnp.float32)],  # accumulator
        ),
        compiler_params=pltpu.CompilerParams(
            dimension_semantics=("parallel", "arbitrary"),
            vmem_limit_bytes=int(vmem_limit),
        ),
    )(a_p, xwg_p, bg_p, w1_p, b1_p, w2_p, b2_p)

    # Slice away the lane / row padding.
    return emb_p[:n, :hidden], out_p[:n, :out_dim]


def build_normalized_adjacency(edge_index, num_nodes):
    """Dense GCN-style A_hat = D^-1/2 (A + I) D^-1/2 from a (2, E) edge_index."""
    src, dst = edge_index[0], edge_index[1]
    adj = jnp.zeros((num_nodes, num_nodes), jnp.float32)
    adj = adj.at[src, dst].set(1.0)
    adj = adj.at[dst, src].set(1.0)                      # treat as undirected
    adj = adj + jnp.eye(num_nodes, dtype=jnp.float32)    # self loops
    deg = jnp.sum(adj, axis=1)
    d_inv_sqrt = 1.0 / jnp.sqrt(jnp.maximum(deg, 1.0))
    return adj * d_inv_sqrt[:, None] * d_inv_sqrt[None, :]


if __name__ == "__main__":
    # Small deterministic shapes: 256 nodes, 8 input features, hidden 32
    # (padded to 128 lanes), out 16 (padded to 128 lanes).  With the clamped
    # tile sizes the whole problem runs as a single (1,1) VMEM-resident block.
    N, F_IN, HIDDEN, OUT = 256, 8, 32, 16

    key = jax.random.PRNGKey(0)
    k_x, k_wg, k_bg, k_w1, k_b1, k_w2, k_b2 = jax.random.split(key, 7)

    # Node features.
    x = jax.random.normal(k_x, (N, F_IN), dtype=jnp.float32)

    # Ring graph edge_index, shape (2, E) like PyG.
    src = jnp.arange(N, dtype=jnp.int32)
    dst = (src + 1) % N
    edge_index = jnp.stack([src, dst], axis=0)
    a_hat = build_normalized_adjacency(edge_index, N)

    # Deterministic parameter init (synthetic; no checkpoint loading).
    wg = jax.random.normal(k_wg, (F_IN, HIDDEN), jnp.float32) * (1.0 / F_IN ** 0.5)
    bg = jax.random.normal(k_bg, (HIDDEN,), jnp.float32) * 0.1
    w1 = jax.random.normal(k_w1, (HIDDEN, HIDDEN), jnp.float32) * (1.0 / HIDDEN ** 0.5)
    b1 = jax.random.normal(k_b1, (HIDDEN,), jnp.float32) * 0.1
    w2 = jax.random.normal(k_w2, (HIDDEN, OUT), jnp.float32) * (1.0 / HIDDEN ** 0.5)
    b2 = jax.random.normal(k_b2, (OUT,), jnp.float32) * 0.1

    emb, out = pretrain_forward(a_hat, x, wg, bg, w1, b1, w2, b2)
    jax.block_until_ready((emb, out))

    # Pure-JAX reference with the same bf16-operand / f32-accumulate semantics.
    def _bf(v):
        return v.astype(jnp.bfloat16).astype(jnp.float32)

    hp = jax.lax.Precision.HIGHEST
    xwg_r = jnp.dot(x, wg, precision=hp)
    h_r = jnp.maximum(jnp.dot(_bf(a_hat), _bf(xwg_r), precision=hp) + bg, 0.0)
    m_r = jnp.maximum(jnp.dot(_bf(h_r), _bf(w1), precision=hp) + b1, 0.0)
    out_r = jnp.dot(_bf(m_r), _bf(w2), precision=hp) + b2

    assert emb.shape == (N, HIDDEN) and out.shape == (N, OUT)
    assert jnp.allclose(emb.astype(jnp.float32), h_r, atol=2e-2, rtol=2e-2), \
        "embedding mismatch"
    assert jnp.allclose(out, out_r, atol=2e-2, rtol=2e-2), "output mismatch"

    print("KERNEL_OK")
</pallas_src>

<mosaic_0001>
module attributes {stable_mosaic.version = 11 : i64} {
  func.func @_pretrain_kernel(%arg0: i32, %arg1: i32, %arg2: memref<256x256xbf16, #tpu.memory_space<vmem>>, %arg3: memref<256x128xbf16, #tpu.memory_space<vmem>>, %arg4: memref<1x128xf32, #tpu.memory_space<vmem>>, %arg5: memref<128x128xbf16, #tpu.memory_space<vmem>>, %arg6: memref<1x128xf32, #tpu.memory_space<vmem>>, %arg7: memref<128x128xbf16, #tpu.memory_space<vmem>>, %arg8: memref<1x128xf32, #tpu.memory_space<vmem>>, %arg9: memref<256x128xbf16, #tpu.memory_space<vmem>>, %arg10: memref<256x128xf32, #tpu.memory_space<vmem>>, %arg11: memref<256x128xf32, #tpu.memory_space<vmem>>) attributes {dimension_semantics = [#tpu.dimension_semantics<parallel>, #tpu.dimension_semantics<arbitrary>], iteration_bounds = array<i64: 1, 1>, scalar_prefetch = 0 : i64, scratch_operands = 1 : i64, tpu.core_type = #tpu.core_type<tc>, window_params = [{transform_indices = @transform_0, window_bounds = array<i64: 256, 256>}, {transform_indices = @transform_1, window_bounds = array<i64: 256, 128>}, {pipeline_mode = #tpu.pipeline_mode<synchronous>, transform_indices = @transform_2, window_bounds = array<i64: 1, 128>}, {pipeline_mode = #tpu.pipeline_mode<synchronous>, transform_indices = @transform_3, window_bounds = array<i64: 128, 128>}, {pipeline_mode = #tpu.pipeline_mode<synchronous>, transform_indices = @transform_4, window_bounds = array<i64: 1, 128>}, {pipeline_mode = #tpu.pipeline_mode<synchronous>, transform_indices = @transform_5, window_bounds = array<i64: 128, 128>}, {pipeline_mode = #tpu.pipeline_mode<synchronous>, transform_indices = @transform_6, window_bounds = array<i64: 1, 128>}, {transform_indices = @transform_7, window_bounds = array<i64: 256, 128>}, {transform_indices = @transform_8, window_bounds = array<i64: 256, 128>}]} {
    %c0_i32 = arith.constant 0 : i32
    %0 = arith.cmpi eq, %arg1, %c0_i32 : i32
    %1 = arith.extui %0 : i1 to i32
    %c0_i32_0 = arith.constant 0 : i32
    %2 = arith.cmpi ne, %1, %c0_i32_0 : i32
    scf.if %2 {
      %c0_10 = arith.constant 0 : index
      %c0_11 = arith.constant 0 : index
      %12 = vector.load %arg4[%c0_10, %c0_11] : memref<1x128xf32, #tpu.memory_space<vmem>>, vector<1x128xf32>
      %13 = vector.shape_cast %12 : vector<1x128xf32> to vector<1x128xf32>
      %14 = vector.broadcast %13 : vector<1x128xf32> to vector<256x128xf32>
      %c0_12 = arith.constant 0 : index
      %c0_13 = arith.constant 0 : index
      %15 = vector.load %arg11[%c0_12, %c0_13] : memref<256x128xf32, #tpu.memory_space<vmem>>, vector<256x128xf32>
      tpu.vector_store %arg11[%c0_12, %c0_13], %14 {strides = array<i32>} : memref<256x128xf32, #tpu.memory_space<vmem>>, vector<256x128xf32>,
    } else {
    }
    %c0 = arith.constant 0 : index
    %c0_1 = arith.constant 0 : index
    %3 = vector.load %arg11[%c0, %c0_1] : memref<256x128xf32, #tpu.memory_space<vmem>>, vector<256x128xf32>
    %c0_2 = arith.constant 0 : index
    %c0_3 = arith.constant 0 : index
    %4 = vector.load %arg2[%c0_2, %c0_3] : memref<256x256xbf16, #tpu.memory_space<vmem>>, vector<256x256xbf16>
    %c0_4 = arith.constant 0 : index
    %c0_5 = arith.constant 0 : index
    %5 = vector.load %arg3[%c0_4, %c0_5] : memref<256x128xbf16, #tpu.memory_space<vmem>>, vector<256x128xbf16>
    %cst = arith.constant dense<0.000000e+00> : vector<256x128xf32>
    %6 = tpu.matmul %4, %5, %cst {dimension_numbers = #tpu.dot_dimension_numbers<[1], [0], [0], [1], [0, 0, 1, 1], [], []>} : vector<256x256xbf16>, vector<256x128xbf16>, vector<256x128xf32> -> vector<256x128xf32>
    %7 = arith.addf %3, %6 : vector<256x128xf32>
    %c0_6 = arith.constant 0 : index
    %c0_7 = arith.constant 0 : index
    %8 = vector.load %arg11[%c0_6, %c0_7] : memref<256x128xf32, #tpu.memory_space<vmem>>, vector<256x128xf32>
    tpu.vector_store %arg11[%c0_6, %c0_7], %7 {strides = array<i32>} : memref<256x128xf32, #tpu.memory_space<vmem>>, vector<256x128xf32>,
    %c0_i32_8 = arith.constant 0 : i32
    %9 = arith.cmpi eq, %arg1, %c0_i32_8 : i32
    %10 = arith.extui %9 : i1 to i32
    %c0_i32_9 = arith.constant 0 : i32
    %11 = arith.cmpi ne, %10, %c0_i32_9 : i32
    scf.if %11 {
      %c0_10 = arith.constant 0 : index
      %c0_11 = arith.constant 0 : index
      %12 = vector.load %arg11[%c0_10, %c0_11] : memref<256x128xf32, #tpu.memory_space<vmem>>, vector<256x128xf32>
      %cst_12 = arith.constant 0.000000e+00 : f32
      %13 = vector.broadcast %cst_12 : f32 to vector<256x128xf32>
      %14 = arith.maximumf %12, %13 : vector<256x128xf32>
      %15 = arith.truncf %14 : vector<256x128xf32> to vector<256x128xbf16>
      %c0_13 = arith.constant 0 : index
      %c0_14 = arith.constant 0 : index
      %16 = vector.load %arg9[%c0_13, %c0_14] : memref<256x128xbf16, #tpu.memory_space<vmem>>, vector<256x128xbf16>
      tpu.vector_store %arg9[%c0_13, %c0_14], %15 {strides = array<i32>} : memref<256x128xbf16, #tpu.memory_space<vmem>>, vector<256x128xbf16>,
      %17 = arith.truncf %14 : vector<256x128xf32> to vector<256x128xbf16>
      %c0_15 = arith.constant 0 : index
      %c0_16 = arith.constant 0 : index
      %18 = vector.load %arg5[%c0_15, %c0_16] : memref<128x128xbf16, #tpu.memory_space<vmem>>, vector<128x128xbf16>
      %cst_17 = arith.constant dense<0.000000e+00> : vector<256x128xf32>
      %19 = tpu.matmul %17, %18, %cst_17 {dimension_numbers = #tpu.dot_dimension_numbers<[1], [0], [0], [1], [0, 0, 1, 1], [], []>} : vector<256x128xbf16>, vector<128x128xbf16>, vector<256x128xf32> -> vector<256x128xf32>
      %c0_18 = arith.constant 0 : index
      %c0_19 = arith.constant 0 : index
      %20 = vector.load %arg6[%c0_18, %c0_19] : memref<1x128xf32, #tpu.memory_space<vmem>>, vector<1x128xf32>
      %21 = vector.broadcast %20 : vector<1x128xf32> to vector<256x128xf32>
      %22 = arith.addf %19, %21 : vector<256x128xf32>
      %cst_20 = arith.constant 0.000000e+00 : f32
      %23 = vector.broadcast %cst_20 : f32 to vector<256x128xf32>
      %24 = arith.maximumf %22, %23 : vector<256x128xf32>
      %25 = arith.truncf %24 : vector<256x128xf32> to vector<256x128xbf16>
      %c0_21 = arith.constant 0 : index
      %c0_22 = arith.constant 0 : index
      %26 = vector.load %arg7[%c0_21, %c0_22] : memref<128x128xbf16, #tpu.memory_space<vmem>>, vector<128x128xbf16>
      %cst_23 = arith.constant dense<0.000000e+00> : vector<256x128xf32>
      %27 = tpu.matmul %25, %26, %cst_23 {dimension_numbers = #tpu.dot_dimension_numbers<[1], [0], [0], [1], [0, 0, 1, 1], [], []>} : vector<256x128xbf16>, vector<128x128xbf16>, vector<256x128xf32> -> vector<256x128xf32>
      %c0_24 = arith.constant 0 : index
      %c0_25 = arith.constant 0 : index
      %28 = vector.load %arg8[%c0_24, %c0_25] : memref<1x128xf32, #tpu.memory_space<vmem>>, vector<1x128xf32>
      %29 = vector.broadcast %28 : vector<1x128xf32> to vector<256x128xf32>
      %30 = arith.addf %27, %29 : vector<256x128xf32>
      %c0_26 = arith.constant 0 : index
      %c0_27 = arith.constant 0 : index
      %31 = vector.load %arg10[%c0_26, %c0_27] : memref<256x128xf32, #tpu.memory_space<vmem>>, vector<256x128xf32>
      tpu.vector_store %arg10[%c0_26, %c0_27], %30 {strides = array<i32>} : memref<256x128xf32, #tpu.memory_space<vmem>>, vector<256x128xf32>,
    } else {
    }
    return
  }
  func.func @transform_0(%arg0: i32, %arg1: i32) -> (i32, i32) {
    %c0_i32 = arith.constant 0 : i32
    return %arg0, %arg1 : i32, i32
  }
  func.func @transform_1(%arg0: i32, %arg1: i32) -> (i32, i32) {
    %c0_i32 = arith.constant 0 : i32
    %c0_i32_0 = arith.constant 0 : i32
    return %arg1, %c0_i32 : i32, i32
  }
  func.func @transform_2(%arg0: i32, %arg1: i32) -> (i32, i32) {
    %c0_i32 = arith.constant 0 : i32
    %c0_i32_0 = arith.constant 0 : i32
    %c0_i32_1 = arith.constant 0 : i32
    return %c0_i32, %c0_i32_0 : i32, i32
  }
  func.func @transform_3(%arg0: i32, %arg1: i32) -> (i32, i32) {
    %c0_i32 = arith.constant 0 : i32
    %c0_i32_0 = arith.constant 0 : i32
    %c0_i32_1 = arith.constant 0 : i32
    return %c0_i32, %c0_i32_0 : i32, i32
  }
  func.func @transform_4(%arg0: i32, %arg1: i32) -> (i32, i32) {
    %c0_i32 = arith.constant 0 : i32
    %c0_i32_0 = arith.constant 0 : i32
    %c0_i32_1 = arith.constant 0 : i32
    return %c0_i32, %c0_i32_0 : i32, i32
  }
  func.func @transform_5(%arg0: i32, %arg1: i32) -> (i32, i32) {
    %c0_i32 = arith.constant 0 : i32
    %c0_i32_0 = arith.constant 0 : i32
    %c0_i32_1 = arith.constant 0 : i32
    return %c0_i32, %c0_i32_0 : i32, i32
  }
  func.func @transform_6(%arg0: i32, %arg1: i32) -> (i32, i32) {
    %c0_i32 = arith.constant 0 : i32
    %c0_i32_0 = arith.constant 0 : i32
    %c0_i32_1 = arith.constant 0 : i32
    return %c0_i32, %c0_i32_0 : i32, i32
  }
  func.func @transform_7(%arg0: i32, %arg1: i32) -> (i32, i32) {
    %c0_i32 = arith.constant 0 : i32
    %c0_i32_0 = arith.constant 0 : i32
    return %arg0, %c0_i32 : i32, i32
  }
  func.func @transform_8(%arg0: i32, %arg1: i32) -> (i32, i32) {
    %c0_i32 = arith.constant 0 : i32
    %c0_i32_0 = arith.constant 0 : i32
    return %arg0, %c0_i32 : i32, i32
  }
}

</mosaic_0001>

<llo_original>
// kernel: tpu_custom_call.1
$region0: #{tpu_custom_call.1}
  #allocation0 [shape = 'u32[]', space=smem, size = 0x4, offset = 0x4, fixed_abs, tag = 'smem constant byte address 0x4 - core index']
  #allocation1 [shape = 'u32[144,128]{1,0:T(1,128)}', space=vmem, size = 0x12000, scoped, tag = 'internal scratch']
  #allocation2 [shape = 'f32[256,128]{1,0:T(8,128)}', space=vmem, size = 0x20000, scoped, tag = 'scratch operand']
  %s0 = inlined_call_operand.hbm [shape: bf16[256,256], index: 0, kind: input, shape index: {}]
  %s1 = inlined_call_operand.hbm [shape: bf16[256,128], index: 1, kind: input, shape index: {}]
  %s2 = inlined_call_operand.vmem [shape: f32[1,128], index: 2, kind: input, shape index: {}]
  %s3 = inlined_call_operand.hbm [shape: bf16[128,128], index: 3, kind: input, shape index: {}]
  %s4 = inlined_call_operand.vmem [shape: f32[1,128], index: 4, kind: input, shape index: {}]
  %s5 = inlined_call_operand.hbm [shape: bf16[128,128], index: 5, kind: input, shape index: {}]
  %s6 = inlined_call_operand.vmem [shape: f32[1,128], index: 6, kind: input, shape index: {}]
  %s7 = inlined_call_operand.hbm [shape: bf16[256,128], index: 7, kind: output, shape index: {0}]
  %s8 = inlined_call_operand.hbm [shape: f32[256,128], index: 8, kind: output, shape index: {1}]
  %9 = xla_tuple %s7, %s8
  %s10 = sld [smem:[#allocation0]]
  $region70: #{tpu_custom_call.1} parent=0
    _
  %s12 = ssub.s32 1, %s10
  %s13 = scalar_select 0, %s12, %s10
  $region1: #{tpu_custom_call.1} parent=0
    #allocation3 [shape = 'u8[131072]{0}', space=vmem, size = 0x20000, scoped, tag = 'input window, operand 0, single buffered']
    #allocation4 [shape = 's32[1]{0}', space=sflag, size = 0x4, scoped, tag = 'scoped memory for tpu_custom_call.1']
    #allocation5 [shape = 's32[1]{0}', space=sflag, size = 0x4, scoped, tag = 'scoped memory for tpu_custom_call.1']
    #allocation6 [shape = 'u8[65536]{0}', space=vmem, size = 0x10000, scoped, tag = 'input window, operand 1, single buffered']
    #allocation7 [shape = 's32[1]{0}', space=sflag, size = 0x4, scoped, tag = 'scoped memory for tpu_custom_call.1']
    #allocation8 [shape = 'u8[32768]{0}', space=vmem, size = 0x8000, scoped, tag = 'input window, operand 3, single buffered']
    #allocation9 [shape = 'u8[32768]{0}', space=vmem, size = 0x8000, scoped, tag = 'input window, operand 5, single buffered']
    #allocation10 [shape = 's32[1]{0}', space=sflag, size = 0x4, scoped, tag = 'scoped memory for tpu_custom_call.1']
    #allocation11 [shape = 'u8[65536]{0}', space=vmem, size = 0x10000, scoped, tag = 'output window, operand 0, single buffered']
    #allocation12 [shape = 'u8[131072]{0}', space=vmem, size = 0x20000, scoped, tag = 'output window, operand 1, single buffered']
    #allocation13 [shape = 's32[1]{0}', space=sflag, size = 0x4, scoped, tag = 'scoped memory for tpu_custom_call.1']
    %14 = vsyncpa [#allocation4], 0
    %15 = vsyncpa [#allocation7], 0
    %16 = vsyncpa [#allocation10], 0
    %17 = vsyncpa [#allocation5], 0
    %18 = vsyncpa [#allocation13], 0
    // Predicated region
    $region2: #{tpu_custom_call.1} parent=1 // pred_check
      _
    $region3: #{tpu_custom_call.1} parent=1 // pred_check_branch
      %20 = sbr.rel (0) target = $region5
    $region4: #{tpu_custom_call.1} parent=1 // pred_region
      %s22 = ssub.s32 4096, 4096
      %23 = vsyncadd [#allocation4], %s22
      %s24 = sshll.u32 [#allocation3], 4
      %s25 = int_to_ptr.vmem [resolvable:$true] %s24
      %30 = dma.hbm_to_vmem [thread:$0]  %s0, 4096, %s25, [#allocation4], 128, 128, 8
    $region5: #{tpu_custom_call.1} parent=1 // pred_fallthru
      _
    // Predicated region
    $region6: #{tpu_custom_call.1} parent=1 // pred_check
      _
    $region7: #{tpu_custom_call.1} parent=1 // pred_check_branch
      %32 = sbr.rel (0) target = $region9
    $region8: #{tpu_custom_call.1} parent=1 // pred_region
      %s34 = ssub.s32 2048, 2048
      %35 = vsyncadd [#allocation7], %s34
      %s36 = sshll.u32 [#allocation6], 4
      %s37 = int_to_ptr.vmem [resolvable:$true] %s36
      %42 = dma.hbm_to_vmem [thread:$0]  %s1, 2048, %s37, [#allocation7], 64, 64, 4
    $region9: #{tpu_custom_call.1} parent=1 // pred_fallthru
      _
    // Predicated region
    $region10: #{tpu_custom_call.1} parent=1 // pred_check
      _
    $region11: #{tpu_custom_call.1} parent=1 // pred_check_branch
      %44 = sbr.rel (0) target = $region13
    $region12: #{tpu_custom_call.1} parent=1 // pred_region
      _
    $region13: #{tpu_custom_call.1} parent=1 // pred_fallthru
      _
    // Predicated region
    $region14: #{tpu_custom_call.1} parent=1 // pred_check
      _
    $region15: #{tpu_custom_call.1} parent=1 // pred_check_branch
      %46 = sbr.rel (0) target = $region17
    $region16: #{tpu_custom_call.1} parent=1 // pred_region
      %s48 = ssub.s32 1024, 1024
      %49 = vsyncadd [#allocation7], %s48
      %s50 = sshll.u32 [#allocation8], 4
      %s51 = int_to_ptr.vmem [resolvable:$true] %s50
      %56 = dma.hbm_to_vmem [thread:$0]  %s3, 1024, %s51, [#allocation7], 64, 64, 4
    $region17: #{tpu_custom_call.1} parent=1 // pred_fallthru
      _
    // Predicated region
    $region18: #{tpu_custom_call.1} parent=1 // pred_check
      _
    $region19: #{tpu_custom_call.1} parent=1 // pred_check_branch
      %58 = sbr.rel (0) target = $region21
    $region20: #{tpu_custom_call.1} parent=1 // pred_region
      _
    $region21: #{tpu_custom_call.1} parent=1 // pred_fallthru
      _
    // Predicated region
    $region22: #{tpu_custom_call.1} parent=1 // pred_check
      _
    $region23: #{tpu_custom_call.1} parent=1 // pred_check_branch
      %60 = sbr.rel (0) target = $region25
    $region24: #{tpu_custom_call.1} parent=1 // pred_region
      %s62 = ssub.s32 1024, 1024
      %63 = vsyncadd [#allocation10], %s62
      %s64 = sshll.u32 [#allocation9], 4
      %s65 = int_to_ptr.vmem [resolvable:$true] %s64
      %70 = dma.hbm_to_vmem [thread:$0]  %s5, 1024, %s65, [#allocation10], 64, 64, 4
    $region25: #{tpu_custom_call.1} parent=1 // pred_fallthru
      _
    // Predicated region
    $region26: #{tpu_custom_call.1} parent=1 // pred_check
      _
    $region27: #{tpu_custom_call.1} parent=1 // pred_check_branch
      %72 = sbr.rel (0) target = $region29
    $region28: #{tpu_custom_call.1} parent=1 // pred_region
      _
    $region29: #{tpu_custom_call.1} parent=1 // pred_fallthru
      _
    // Predicated region
    $region30: #{tpu_custom_call.1} parent=1 // pred_check
      _
    $region31: #{tpu_custom_call.1} parent=1 // pred_check_branch
      %74 = sbr.rel (0) target = $region33
    $region32: #{tpu_custom_call.1} parent=1 // pred_region
      %75 = dma.done [#allocation4], 4096
    $region33: #{tpu_custom_call.1} parent=1 // pred_fallthru
      _
    // Predicated region
    $region34: #{tpu_custom_call.1} parent=1 // pred_check
      _
    $region35: #{tpu_custom_call.1} parent=1 // pred_check_branch
      %77 = sbr.rel (0) target = $region37
    $region36: #{tpu_custom_call.1} parent=1 // pred_region
      %78 = dma.done [#allocation7], 2048
    $region37: #{tpu_custom_call.1} parent=1 // pred_fallthru
      _
    // Predicated region
    $region38: #{tpu_custom_call.1} parent=1 // pred_check
      _
    $region39: #{tpu_custom_call.1} parent=1 // pred_check_branch
      %80 = sbr.rel (0) target = $region41
    $region40: #{tpu_custom_call.1} parent=1 // pred_region
      %81 = dma.done [#allocation7], 1024
    $region41: #{tpu_custom_call.1} parent=1 // pred_fallthru
      _
    // Predicated region
    $region42: #{tpu_custom_call.1} parent=1 // pred_check
      _
    $region43: #{tpu_custom_call.1} parent=1 // pred_check_branch
      %83 = sbr.rel (0) target = $region45
    $region44: #{tpu_custom_call.1} parent=1 // pred_region
      %84 = dma.done [#allocation10], 1024
    $region45: #{tpu_custom_call.1} parent=1 // pred_fallthru
      _
    %p86 = scmp.eq.s32.totalorder 0, 0
    // Predicated region
    $region46: #{tpu_custom_call.1} parent=1 // pred_check
      %p87 = pneg %p86
    $region47: #{tpu_custom_call.1} parent=1 // pred_check_branch
      %89 = sbr.rel (%p87) target = $region49
    $region48: #{tpu_custom_call.1} parent=1 // pred_region
      %v90 = vld [vmem:[%s2] sm:$0x1]
      %v92 = vlaneseq
      %v93 = vshrl.u32 %v92, 7
      %v94 = vsub.s32 0, %v93
      %v95 = vrot.slane %v90, %v94
      %97 = vst [vmem:[#allocation2] sm:$0xff] %v95
      %98 = vst [vmem:[#allocation2 + $0x8] sm:$0xff] %v95
      %99 = vst [vmem:[#allocation2 + $0x10] sm:$0xff] %v95
      %100 = vst [vmem:[#allocation2 + $0x18] sm:$0xff] %v95
      %101 = vst [vmem:[#allocation2 + $0x20] sm:$0xff] %v95
      %102 = vst [vmem:[#allocation2 + $0x28] sm:$0xff] %v95
      %103 = vst [vmem:[#allocation2 + $0x30] sm:$0xff] %v95
      %104 = vst [vmem:[#allocation2 + $0x38] sm:$0xff] %v95
      %105 = vst [vmem:[#allocation2 + $0x40] sm:$0xff] %v95
      %106 = vst [vmem:[#allocation2 + $0x48] sm:$0xff] %v95
      %107 = vst [vmem:[#allocation2 + $0x50] sm:$0xff] %v95
      %108 = vst [vmem:[#allocation2 + $0x58] sm:$0xff] %v95
      %109 = vst [vmem:[#allocation2 + $0x60] sm:$0xff] %v95
      %110 = vst [vmem:[#allocation2 + $0x68] sm:$0xff] %v95
      %111 = vst [vmem:[#allocation2 + $0x70] sm:$0xff] %v95
      %112 = vst [vmem:[#allocation2 + $0x78] sm:$0xff] %v95
      %113 = vst [vmem:[#allocation2 + $0x80] sm:$0xff] %v95
      %114 = vst [vmem:[#allocation2 + $0x88] sm:$0xff] %v95
      %115 = vst [vmem:[#allocation2 + $0x90] sm:$0xff] %v95
      %116 = vst [vmem:[#allocation2 + $0x98] sm:$0xff] %v95
      %117 = vst [vmem:[#allocation2 + $0xa0] sm:$0xff] %v95
      %118 = vst [vmem:[#allocation2 + $0xa8] sm:$0xff] %v95
      %119 = vst [vmem:[#allocation2 + $0xb0] sm:$0xff] %v95
      %120 = vst [vmem:[#allocation2 + $0xb8] sm:$0xff] %v95
      %121 = vst [vmem:[#allocation2 + $0xc0] sm:$0xff] %v95
      %122 = vst [vmem:[#allocation2 + $0xc8] sm:$0xff] %v95
      %123 = vst [vmem:[#allocation2 + $0xd0] sm:$0xff] %v95
      %124 = vst [vmem:[#allocation2 + $0xd8] sm:$0xff] %v95
      %125 = vst [vmem:[#allocation2 + $0xe0] sm:$0xff] %v95
      %126 = vst [vmem:[#allocation2 + $0xe8] sm:$0xff] %v95
      %127 = vst [vmem:[#allocation2 + $0xf0] sm:$0xff] %v95
      %128 = vst [vmem:[#allocation2 + $0xf8] sm:$0xff] %v95
    $region49: #{tpu_custom_call.1} parent=1 // pred_fallthru
      _
    %v129 = vld [vmem:[#allocation2] sm:$0xff]
    %v130 = vld [vmem:[#allocation2 + $0x8] sm:$0xff]
    %v131 = vld [vmem:[#allocation2 + $0x10] sm:$0xff]
    %v132 = vld [vmem:[#allocation2 + $0x18] sm:$0xff]
    %v133 = vld [vmem:[#allocation2 + $0x20] sm:$0xff]
    %v134 = vld [vmem:[#allocation2 + $0x28] sm:$0xff]
    %v135 = vld [vmem:[#allocation2 + $0x30] sm:$0xff]
    %v136 = vld [vmem:[#allocation2 + $0x38] sm:$0xff]
    %v137 = vld [vmem:[#allocation2 + $0x40] sm:$0xff]
    %v138 = vld [vmem:[#allocation2 + $0x48] sm:$0xff]
    %v139 = vld [vmem:[#allocation2 + $0x50] sm:$0xff]
    %v140 = vld [vmem:[#allocation2 + $0x58] sm:$0xff]
    %v141 = vld [vmem:[#allocation2 + $0x60] sm:$0xff]
    %v142 = vld [vmem:[#allocation2 + $0x68] sm:$0xff]
    %v143 = vld [vmem:[#allocation2 + $0x70] sm:$0xff]
    %v144 = vld [vmem:[#allocation2 + $0x78] sm:$0xff]
    %v145 = vld [vmem:[#allocation2 + $0x80] sm:$0xff]
    %v146 = vld [vmem:[#allocation2 + $0x88] sm:$0xff]
    %v147 = vld [vmem:[#allocation2 + $0x90] sm:$0xff]
    %v148 = vld [vmem:[#allocation2 + $0x98] sm:$0xff]
    %v149 = vld [vmem:[#allocation2 + $0xa0] sm:$0xff]
    %v150 = vld [vmem:[#allocation2 + $0xa8] sm:$0xff]
    %v151 = vld [vmem:[#allocation2 + $0xb0] sm:$0xff]
    %v152 = vld [vmem:[#allocation2 + $0xb8] sm:$0xff]
    %v153 = vld [vmem:[#allocation2 + $0xc0] sm:$0xff]
    %v154 = vld [vmem:[#allocation2 + $0xc8] sm:$0xff]
    %v155 = vld [vmem:[#allocation2 + $0xd0] sm:$0xff]
    %v156 = vld [vmem:[#allocation2 + $0xd8] sm:$0xff]
    %v157 = vld [vmem:[#allocation2 + $0xe0] sm:$0xff]
    %v158 = vld [vmem:[#allocation2 + $0xe8] sm:$0xff]
    %v159 = vld [vmem:[#allocation2 + $0xf0] sm:$0xff]
    %v160 = vld [vmem:[#allocation2 + $0xf8] sm:$0xff]
    %v161 = vld [vmem:[#allocation3] sm:$0xff]
    %v162 = vld [vmem:[#allocation3 + $0x8] sm:$0xff]
    %v163 = vld [vmem:[#allocation3 + $0x10] sm:$0xff]
    %v164 = vld [vmem:[#allocation3 + $0x18] sm:$0xff]
    %v165 = vld [vmem:[#allocation3 + $0x20] sm:$0xff]
    %v166 = vld [vmem:[#allocation3 + $0x28] sm:$0xff]
    %v167 = vld [vmem:[#allocation3 + $0x30] sm:$0xff]
    %v168 = vld [vmem:[#allocation3 + $0x38] sm:$0xff]
    %v169 = vld [vmem:[#allocation3 + $0x40] sm:$0xff]
    %v170 = vld [vmem:[#allocation3 + $0x48] sm:$0xff]
    %v171 = vld [vmem:[#allocation3 + $0x50] sm:$0xff]
    %v172 = vld [vmem:[#allocation3 + $0x58] sm:$0xff]
    %v173 = vld [vmem:[#allocation3 + $0x60] sm:$0xff]
    %v174 = vld [vmem:[#allocation3 + $0x68] sm:$0xff]
    %v175 = vld [vmem:[#allocation3 + $0x70] sm:$0xff]
    %v176 = vld [vmem:[#allocation3 + $0x78] sm:$0xff]
    %v177 = vld [vmem:[#allocation3 + $0x80] sm:$0xff]
    %v178 = vld [vmem:[#allocation3 + $0x88] sm:$0xff]
    %v179 = vld [vmem:[#allocation3 + $0x90] sm:$0xff]
    %v180 = vld [vmem:[#allocation3 + $0x98] sm:$0xff]
    %v181 = vld [vmem:[#allocation3 + $0xa0] sm:$0xff]
    %v182 = vld [vmem:[#allocation3 + $0xa8] sm:$0xff]
    %v183 = vld [vmem:[#allocation3 + $0xb0] sm:$0xff]
    %v184 = vld [vmem:[#allocation3 + $0xb8] sm:$0xff]
    %v185 = vld [vmem:[#allocation3 + $0xc0] sm:$0xff]
    %v186 = vld [vmem:[#allocation3 + $0xc8] sm:$0xff]
    %v187 = vld [vmem:[#allocation3 + $0xd0] sm:$0xff]
    %v188 = vld [vmem:[#allocation3 + $0xd8] sm:$0xff]
    %v189 = vld [vmem:[#allocation3 + $0xe0] sm:$0xff]
    %v190 = vld [vmem:[#allocation3 + $0xe8] sm:$0xff]
    %v191 = vld [vmem:[#allocation3 + $0xf0] sm:$0xff]
    %v192 = vld [vmem:[#allocation3 + $0xf8] sm:$0xff]
    %v193 = vld [vmem:[#allocation6] sm:$0xf]
    %v194 = vld [vmem:[#allocation6 + $0x4] sm:$0xf]
    %v195 = vld [vmem:[#allocation6 + $0x8] sm:$0xf]
    %v196 = vld [vmem:[#allocation6 + $0xc] sm:$0xf]
    %v197 = vld [vmem:[#allocation6 + $0x10] sm:$0xf]
    %v198 = vld [vmem:[#allocation6 + $0x14] sm:$0xf]
    %v199 = vld [vmem:[#allocation6 + $0x18] sm:$0xf]
    %v200 = vld [vmem:[#allocation6 + $0x1c] sm:$0xf]
    %v201 = vld [vmem:[#allocation6 + $0x20] sm:$0xf]
    %v202 = vld [vmem:[#allocation6 + $0x24] sm:$0xf]
    %v203 = vld [vmem:[#allocation6 + $0x28] sm:$0xf]
    %v204 = vld [vmem:[#allocation6 + $0x2c] sm:$0xf]
    %v205 = vld [vmem:[#allocation6 + $0x30] sm:$0xf]
    %v206 = vld [vmem:[#allocation6 + $0x34] sm:$0xf]
    %v207 = vld [vmem:[#allocation6 + $0x38] sm:$0xf]
    %v208 = vld [vmem:[#allocation6 + $0x3c] sm:$0xf]
    %v209 = vld [vmem:[#allocation6 + $0x40] sm:$0xf]
    %v210 = vld [vmem:[#allocation6 + $0x44] sm:$0xf]
    %v211 = vld [vmem:[#allocation6 + $0x48] sm:$0xf]
    %v212 = vld [vmem:[#allocation6 + $0x4c] sm:$0xf]
    %v213 = vld [vmem:[#allocation6 + $0x50] sm:$0xf]
    %v214 = vld [vmem:[#allocation6 + $0x54] sm:$0xf]
    %v215 = vld [vmem:[#allocation6 + $0x58] sm:$0xf]
    %v216 = vld [vmem:[#allocation6 + $0x5c] sm:$0xf]
    %v217 = vld [vmem:[#allocation6 + $0x60] sm:$0xf]
    %v218 = vld [vmem:[#allocation6 + $0x64] sm:$0xf]
    %v219 = vld [vmem:[#allocation6 + $0x68] sm:$0xf]
    %v220 = vld [vmem:[#allocation6 + $0x6c] sm:$0xf]
    %v221 = vld [vmem:[#allocation6 + $0x70] sm:$0xf]
    %v222 = vld [vmem:[#allocation6 + $0x74] sm:$0xf]
    %v223 = vld [vmem:[#allocation6 + $0x78] sm:$0xf]
    %v224 = vld [vmem:[#allocation6 + $0x7c] sm:$0xf]
    %v257 = vunpack.c.l.b16 %v161
    %v258 = vunpack.c.h.b16 %v161
    %v259 = vunpack.c.l.b16 %v162
    %v260 = vunpack.c.h.b16 %v162
    %v261 = vunpack.c.l.b16 %v163
    %v262 = vunpack.c.h.b16 %v163
    %v263 = vunpack.c.l.b16 %v164
    %v264 = vunpack.c.h.b16 %v164
    %v265 = vunpack.c.l.b16 %v165
    %v266 = vunpack.c.h.b16 %v165
    %v267 = vunpack.c.l.b16 %v166
    %v268 = vunpack.c.h.b16 %v166
    %v269 = vunpack.c.l.b16 %v167
    %v270 = vunpack.c.h.b16 %v167
    %v271 = vunpack.c.l.b16 %v168
    %v272 = vunpack.c.h.b16 %v168
    %v273 = vunpack.c.l.b16 %v169
    %v274 = vunpack.c.h.b16 %v169
    %v275 = vunpack.c.l.b16 %v170
    %v276 = vunpack.c.h.b16 %v170
    %v277 = vunpack.c.l.b16 %v171
    %v278 = vunpack.c.h.b16 %v171
    %v279 = vunpack.c.l.b16 %v172
    %v280 = vunpack.c.h.b16 %v172
    %v281 = vunpack.c.l.b16 %v173
    %v282 = vunpack.c.h.b16 %v173
    %v283 = vunpack.c.l.b16 %v174
    %v284 = vunpack.c.h.b16 %v174
    %v285 = vunpack.c.l.b16 %v175
    %v286 = vunpack.c.h.b16 %v175
    %v287 = vunpack.c.l.b16 %v176
    %v288 = vunpack.c.h.b16 %v176
    %v289 = vunpack.c.l.b16 %v177
    %v290 = vunpack.c.h.b16 %v177
    %v291 = vunpack.c.l.b16 %v178
    %v292 = vunpack.c.h.b16 %v178
    %v293 = vunpack.c.l.b16 %v179
    %v294 = vunpack.c.h.b16 %v179
    %v295 = vunpack.c.l.b16 %v180
    %v296 = vunpack.c.h.b16 %v180
    %v297 = vunpack.c.l.b16 %v181
    %v298 = vunpack.c.h.b16 %v181
    %v299 = vunpack.c.l.b16 %v182
    %v300 = vunpack.c.h.b16 %v182
    %v301 = vunpack.c.l.b16 %v183
    %v302 = vunpack.c.h.b16 %v183
    %v303 = vunpack.c.l.b16 %v184
    %v304 = vunpack.c.h.b16 %v184
    %v305 = vunpack.c.l.b16 %v185
    %v306 = vunpack.c.h.b16 %v185
    %v307 = vunpack.c.l.b16 %v186
    %v308 = vunpack.c.h.b16 %v186
    %v309 = vunpack.c.l.b16 %v187
    %v310 = vunpack.c.h.b16 %v187
    %v311 = vunpack.c.l.b16 %v188
    %v312 = vunpack.c.h.b16 %v188
    %v313 = vunpack.c.l.b16 %v189
    %v314 = vunpack.c.h.b16 %v189
    %v315 = vunpack.c.l.b16 %v190
    %v316 = vunpack.c.h.b16 %v190
    %v317 = vunpack.c.l.b16 %v191
    %v318 = vunpack.c.h.b16 %v191
    %v319 = vunpack.c.l.b16 %v192
    %v320 = vunpack.c.h.b16 %v192
    %v321 = vpack.c.b16 %v259, %v257
    %v322 = vpack.c.b16 %v260, %v258
    %v323 = vpack.c.b16 %v263, %v261
    %v324 = vpack.c.b16 %v264, %v262
    %v325 = vpack.c.b16 %v267, %v265
    %v326 = vpack.c.b16 %v268, %v266
    %v327 = vpack.c.b16 %v271, %v269
    %v328 = vpack.c.b16 %v272, %v270
    %v329 = vpack.c.b16 %v275, %v273
    %v330 = vpack.c.b16 %v276, %v274
    %v331 = vpack.c.b16 %v279, %v277
    %v332 = vpack.c.b16 %v280, %v278
    %v333 = vpack.c.b16 %v283, %v281
    %v334 = vpack.c.b16 %v284, %v282
    %v335 = vpack.c.b16 %v287, %v285
    %v336 = vpack.c.b16 %v288, %v286
    %v337 = vpack.c.b16 %v291, %v289
    %v338 = vpack.c.b16 %v292, %v290
    %v339 = vpack.c.b16 %v295, %v293
    %v340 = vpack.c.b16 %v296, %v294
    %v341 = vpack.c.b16 %v299, %v297
    %v342 = vpack.c.b16 %v300, %v298
    %v343 = vpack.c.b16 %v303, %v301
    %v344 = vpack.c.b16 %v304, %v302
    %v345 = vpack.c.b16 %v307, %v305
    %v346 = vpack.c.b16 %v308, %v306
    %v347 = vpack.c.b16 %v311, %v309
    %v348 = vpack.c.b16 %v312, %v310
    %v349 = vpack.c.b16 %v315, %v313
    %v350 = vpack.c.b16 %v316, %v314
    %v351 = vpack.c.b16 %v319, %v317
    %v352 = vpack.c.b16 %v320, %v318
    %v417 = vunpack.c.l.b16 %v193
    %v418 = vunpack.c.l.b16 %v194
    %v419 = vunpack.c.l.b16 %v195
    %v420 = vunpack.c.l.b16 %v196
    %v421 = vunpack.c.l.b16 %v197
    %v422 = vunpack.c.l.b16 %v198
    %v423 = vunpack.c.l.b16 %v199
    %v424 = vunpack.c.l.b16 %v200
    %v425 = vunpack.c.l.b16 %v201
    %v426 = vunpack.c.l.b16 %v202
    %v427 = vunpack.c.l.b16 %v203
    %v428 = vunpack.c.l.b16 %v204
    %v429 = vunpack.c.l.b16 %v205
    %v430 = vunpack.c.l.b16 %v206
    %v431 = vunpack.c.l.b16 %v207
    %v432 = vunpack.c.l.b16 %v208
    %v433 = vunpack.c.l.b16 %v209
    %v434 = vunpack.c.l.b16 %v210
    %v435 = vunpack.c.l.b16 %v211
    %v436 = vunpack.c.l.b16 %v212
    %v437 = vunpack.c.l.b16 %v213
    %v438 = vunpack.c.l.b16 %v214
    %v439 = vunpack.c.l.b16 %v215
    %v440 = vunpack.c.l.b16 %v216
    %v441 = vunpack.c.l.b16 %v217
    %v442 = vunpack.c.l.b16 %v218
    %v443 = vunpack.c.l.b16 %v219
    %v444 = vunpack.c.l.b16 %v220
    %v445 = vunpack.c.l.b16 %v221
    %v446 = vunpack.c.l.b16 %v222
    %v447 = vunpack.c.l.b16 %v223
    %v448 = vunpack.c.l.b16 %v224
    %v449 = vpack.c.b16 %v418, %v417
    %v450 = vpack.c.b16 %v420, %v419
    %v451 = vpack.c.b16 %v422, %v421
    %v452 = vpack.c.b16 %v424, %v423
    %v453 = vpack.c.b16 %v426, %v425
    %v454 = vpack.c.b16 %v428, %v427
    %v455 = vpack.c.b16 %v430, %v429
    %v456 = vpack.c.b16 %v432, %v431
    %v457 = vpack.c.b16 %v434, %v433
    %v458 = vpack.c.b16 %v436, %v435
    %v459 = vpack.c.b16 %v438, %v437
    %v460 = vpack.c.b16 %v440, %v439
    %v461 = vpack.c.b16 %v442, %v441
    %v462 = vpack.c.b16 %v444, %v443
    %v463 = vpack.c.b16 %v446, %v445
    %v464 = vpack.c.b16 %v448, %v447
    %481 = vmatprep.subr.bf16.mxu0 0
    %482 = vmatpush1.bf16.msra.mxu0 %v449
    %483 = vmatprep.subr.bf16.mxu0 0
    %484 = vmatpush1.bf16.msra.mxu0 %v450
    %485 = vmatprep.subr.bf16.mxu0 0
    %486 = vmatpush1.bf16.msra.mxu0 %v451
    %487 = vmatprep.subr.bf16.mxu0 0
    %488 = vmatpush1.bf16.msra.mxu0 %v452
    %489 = vmatprep.subr.bf16.mxu0 0
    %490 = vmatpush1.bf16.msra.mxu0 %v453
    %491 = vmatprep.subr.bf16.mxu0 0
    %492 = vmatpush1.bf16.msra.mxu0 %v454
    %493 = vmatprep.subr.bf16.mxu0 0
    %494 = vmatpush1.bf16.msra.mxu0 %v455
    %495 = vmatprep.subr.bf16.mxu0 0
    %496 = vmatpush1.bf16.msra.mxu0 %v456
    %497 = vmatprep.subr.bf16.mxu0 0
    %498 = vmatpush1.bf16.msra.mxu0 %v457
    %499 = vmatprep.subr.bf16.mxu0 0
    %500 = vmatpush1.bf16.msra.mxu0 %v458
    %501 = vmatprep.subr.bf16.mxu0 0
    %502 = vmatpush1.bf16.msra.mxu0 %v459
    %503 = vmatprep.subr.bf16.mxu0 0
    %504 = vmatpush1.bf16.msra.mxu0 %v460
    %505 = vmatprep.subr.bf16.mxu0 0
    %506 = vmatpush1.bf16.msra.mxu0 %v461
    %507 = vmatprep.subr.bf16.mxu0 0
    %508 = vmatpush1.bf16.msra.mxu0 %v462
    %509 = vmatprep.subr.bf16.mxu0 0
    %510 = vmatpush1.bf16.msra.mxu0 %v463
    %511 = vmatprep.subr.bf16.mxu0 0
    %512 = vmatpush1.bf16.msra.mxu0 %v464
    %513 = vmatprep.mubr.bf16.mxu0 %v322
    %514 = vmatmul.mubr.bf16.gmra.mrb[0].mxu0 %v321
    %v515 = vpop.f32.mrb[0].mxu0
    %v516 = vadd.f32 0.0, %v515
    %v517 = vpop.f32.mrb[0].mxu0
    %v518 = vpop.f32.mrb[0].mxu0
    %v519 = vadd.f32 0.0, %v518
    %v520 = vpop.f32.mrb[0].mxu0
    %521 = vmatprep.mubr.bf16.mxu0 %v324
    %522 = vmatmul.mubr.bf16.gmra.mrb[0].mxu0 %v323
    %v523 = vpop.f32.mrb[0].mxu0
    %v524 = vadd.f32 0.0, %v523
    %v525 = vpop.f32.mrb[0].mxu0
    %v526 = vpop.f32.mrb[0].mxu0
    %v527 = vadd.f32 0.0, %v526
    %v528 = vpop.f32.mrb[0].mxu0
    %529 = vmatprep.mubr.bf16.mxu0 %v326
    %530 = vmatmul.mubr.bf16.gmra.mrb[0].mxu0 %v325
    %v531 = vpop.f32.mrb[0].mxu0
    %v532 = vadd.f32 0.0, %v531
    %v533 = vpop.f32.mrb[0].mxu0
    %v534 = vpop.f32.mrb[0].mxu0
    %v535 = vadd.f32 0.0, %v534
    %v536 = vpop.f32.mrb[0].mxu0
    %537 = vmatprep.mubr.bf16.mxu0 %v328
    %538 = vmatmul.mubr.bf16.gmra.mrb[0].mxu0 %v327
    %v539 = vpop.f32.mrb[0].mxu0
    %v540 = vadd.f32 0.0, %v539
    %v541 = vpop.f32.mrb[0].mxu0
    %v542 = vpop.f32.mrb[0].mxu0
    %v543 = vadd.f32 0.0, %v542
    %v544 = vpop.f32.mrb[0].mxu0
    %545 = vmatprep.mubr.bf16.mxu0 %v330
    %546 = vmatmul.mubr.bf16.gmra.mrb[0].mxu0 %v329
    %v547 = vpop.f32.mrb[0].mxu0
    %v548 = vadd.f32 0.0, %v547
    %v549 = vpop.f32.mrb[0].mxu0
    %v550 = vpop.f32.mrb[0].mxu0
    %v551 = vadd.f32 0.0, %v550
    %v552 = vpop.f32.mrb[0].mxu0
    %553 = vmatprep.mubr.bf16.mxu0 %v332
    %554 = vmatmul.mubr.bf16.gmra.mrb[0].mxu0 %v331
    %v555 = vpop.f32.mrb[0].mxu0
    %v556 = vadd.f32 0.0, %v555
    %v557 = vpop.f32.mrb[0].mxu0
    %v558 = vpop.f32.mrb[0].mxu0
    %v559 = vadd.f32 0.0, %v558
    %v560 = vpop.f32.mrb[0].mxu0
    %561 = vmatprep.mubr.bf16.mxu0 %v334
    %562 = vmatmul.mubr.bf16.gmra.mrb[0].mxu0 %v333
    %v563 = vpop.f32.mrb[0].mxu0
    %v564 = vadd.f32 0.0, %v563
    %v565 = vpop.f32.mrb[0].mxu0
    %v566 = vpop.f32.mrb[0].mxu0
    %v567 = vadd.f32 0.0, %v566
    %v568 = vpop.f32.mrb[0].mxu0
    %569 = vmatprep.mubr.bf16.mxu0 %v336
    %570 = vmatmul.mubr.bf16.gmra.mrb[0].mxu0 %v335
    %v571 = vpop.f32.mrb[0].mxu0
    %v572 = vadd.f32 0.0, %v571
    %v573 = vpop.f32.mrb[0].mxu0
    %v574 = vpop.f32.mrb[0].mxu0
    %v575 = vadd.f32 0.0, %v574
    %v576 = vpop.f32.mrb[0].mxu0
    %577 = vmatprep.mubr.bf16.mxu0 %v338
    %578 = vmatmul.mubr.bf16.gmra.mrb[0].mxu0 %v337
    %v579 = vpop.f32.mrb[0].mxu0
    %v580 = vadd.f32 0.0, %v579
    %v581 = vpop.f32.mrb[0].mxu0
    %v582 = vpop.f32.mrb[0].mxu0
    %v583 = vadd.f32 0.0, %v582
    %v584 = vpop.f32.mrb[0].mxu0
    %585 = vmatprep.mubr.bf16.mxu0 %v340
    %586 = vmatmul.mubr.bf16.gmra.mrb[0].mxu0 %v339
    %v587 = vpop.f32.mrb[0].mxu0
    %v588 = vadd.f32 0.0, %v587
    %v589 = vpop.f32.mrb[0].mxu0
    %v590 = vpop.f32.mrb[0].mxu0
    %v591 = vadd.f32 0.0, %v590
    %v592 = vpop.f32.mrb[0].mxu0
    %593 = vmatprep.mubr.bf16.mxu0 %v342
    %594 = vmatmul.mubr.bf16.gmra.mrb[0].mxu0 %v341
    %v595 = vpop.f32.mrb[0].mxu0
    %v596 = vadd.f32 0.0, %v595
    %v597 = vpop.f32.mrb[0].mxu0
    %v598 = vpop.f32.mrb[0].mxu0
    %v599 = vadd.f32 0.0, %v598
    %v600 = vpop.f32.mrb[0].mxu0
    %601 = vmatprep.mubr.bf16.mxu0 %v344
    %602 = vmatmul.mubr.bf16.gmra.mrb[0].mxu0 %v343
    %v603 = vpop.f32.mrb[0].mxu0
    %v604 = vadd.f32 0.0, %v603
    %v605 = vpop.f32.mrb[0].mxu0
    %v606 = vpop.f32.mrb[0].mxu0
    %v607 = vadd.f32 0.0, %v606
    %v608 = vpop.f32.mrb[0].mxu0
    %609 = vmatprep.mubr.bf16.mxu0 %v346
    %610 = vmatmul.mubr.bf16.gmra.mrb[0].mxu0 %v345
    %v611 = vpop.f32.mrb[0].mxu0
    %v612 = vadd.f32 0.0, %v611
    %v613 = vpop.f32.mrb[0].mxu0
    %v614 = vpop.f32.mrb[0].mxu0
    %v615 = vadd.f32 0.0, %v614
    %v616 = vpop.f32.mrb[0].mxu0
    %617 = vmatprep.mubr.bf16.mxu0 %v348
    %618 = vmatmul.mubr.bf16.gmra.mrb[0].mxu0 %v347
    %v619 = vpop.f32.mrb[0].mxu0
    %v620 = vadd.f32 0.0, %v619
    %v621 = vpop.f32.mrb[0].mxu0
    %v622 = vpop.f32.mrb[0].mxu0
    %v623 = vadd.f32 0.0, %v622
    %v624 = vpop.f32.mrb[0].mxu0
    %625 = vmatprep.mubr.bf16.mxu0 %v350
    %626 = vmatmul.mubr.bf16.gmra.mrb[0].mxu0 %v349
    %v627 = vpop.f32.mrb[0].mxu0
    %v628 = vadd.f32 0.0, %v627
    %v629 = vpop.f32.mrb[0].mxu0
    %v630 = vpop.f32.mrb[0].mxu0
    %v631 = vadd.f32 0.0, %v630
    %v632 = vpop.f32.mrb[0].mxu0
    %633 = vmatprep.mubr.bf16.mxu0 %v352
    %634 = vmatmul.mubr.bf16.gmra.mrb[0].mxu0 %v351
    %v635 = vpop.f32.mrb[0].mxu0
    %v636 = vadd.f32 0.0, %v635
    %v637 = vpop.f32.mrb[0].mxu0
    %v638 = vpop.f32.mrb[0].mxu0
    %v639 = vadd.f32 0.0, %v638
    %v640 = vpop.f32.mrb[0].mxu0
    %641 = vdwg.mxu0
    %v642 = vadd.f32 %v129, %v516
    %v643 = vadd.f32 %v130, %v519
    %v644 = vadd.f32 %v131, %v524
    %v645 = vadd.f32 %v132, %v527
    %v646 = vadd.f32 %v133, %v532
    %v647 = vadd.f32 %v134, %v535
    %v648 = vadd.f32 %v135, %v540
    %v649 = vadd.f32 %v136, %v543
    %v650 = vadd.f32 %v137, %v548
    %v651 = vadd.f32 %v138, %v551
    %v652 = vadd.f32 %v139, %v556
    %v653 = vadd.f32 %v140, %v559
    %v654 = vadd.f32 %v141, %v564
    %v655 = vadd.f32 %v142, %v567
    %v656 = vadd.f32 %v143, %v572
    %v657 = vadd.f32 %v144, %v575
    %v658 = vadd.f32 %v145, %v580
    %v659 = vadd.f32 %v146, %v583
    %v660 = vadd.f32 %v147, %v588
    %v661 = vadd.f32 %v148, %v591
    %v662 = vadd.f32 %v149, %v596
    %v663 = vadd.f32 %v150, %v599
    %v664 = vadd.f32 %v151, %v604
    %v665 = vadd.f32 %v152, %v607
    %v666 = vadd.f32 %v153, %v612
    %v667 = vadd.f32 %v154, %v615
    %v668 = vadd.f32 %v155, %v620
    %v669 = vadd.f32 %v156, %v623
    %v670 = vadd.f32 %v157, %v628
    %v671 = vadd.f32 %v158, %v631
    %v672 = vadd.f32 %v159, %v636
    %v673 = vadd.f32 %v160, %v639
    %674 = vst [vmem:[#allocation2] sm:$0xff] %v642
    %675 = vst [vmem:[#allocation2 + $0x8] sm:$0xff] %v643
    %676 = vst [vmem:[#allocation2 + $0x10] sm:$0xff] %v644
    %677 = vst [vmem:[#allocation2 + $0x18] sm:$0xff] %v645
    %678 = vst [vmem:[#allocation2 + $0x20] sm:$0xff] %v646
    %679 = vst [vmem:[#allocation2 + $0x28] sm:$0xff] %v647
    %680 = vst [vmem:[#allocation2 + $0x30] sm:$0xff] %v648
    %681 = vst [vmem:[#allocation2 + $0x38] sm:$0xff] %v649
    %682 = vst [vmem:[#allocation2 + $0x40] sm:$0xff] %v650
    %683 = vst [vmem:[#allocation2 + $0x48] sm:$0xff] %v651
    %684 = vst [vmem:[#allocation2 + $0x50] sm:$0xff] %v652
    %685 = vst [vmem:[#allocation2 + $0x58] sm:$0xff] %v653
    %686 = vst [vmem:[#allocation2 + $0x60] sm:$0xff] %v654
    %687 = vst [vmem:[#allocation2 + $0x68] sm:$0xff] %v655
    %688 = vst [vmem:[#allocation2 + $0x70] sm:$0xff] %v656
    %689 = vst [vmem:[#allocation2 + $0x78] sm:$0xff] %v657
    %690 = vst [vmem:[#allocation2 + $0x80] sm:$0xff] %v658
    %691 = vst [vmem:[#allocation2 + $0x88] sm:$0xff] %v659
    %692 = vst [vmem:[#allocation2 + $0x90] sm:$0xff] %v660
    %693 = vst [vmem:[#allocation2 + $0x98] sm:$0xff] %v661
    %694 = vst [vmem:[#allocation2 + $0xa0] sm:$0xff] %v662
    %695 = vst [vmem:[#allocation2 + $0xa8] sm:$0xff] %v663
    %696 = vst [vmem:[#allocation2 + $0xb0] sm:$0xff] %v664
    %697 = vst [vmem:[#allocation2 + $0xb8] sm:$0xff] %v665
    %698 = vst [vmem:[#allocation2 + $0xc0] sm:$0xff] %v666
    %699 = vst [vmem:[#allocation2 + $0xc8] sm:$0xff] %v667
    %700 = vst [vmem:[#allocation2 + $0xd0] sm:$0xff] %v668
    %701 = vst [vmem:[#allocation2 + $0xd8] sm:$0xff] %v669
    %702 = vst [vmem:[#allocation2 + $0xe0] sm:$0xff] %v670
    %703 = vst [vmem:[#allocation2 + $0xe8] sm:$0xff] %v671
    %704 = vst [vmem:[#allocation2 + $0xf0] sm:$0xff] %v672
    %705 = vst [vmem:[#allocation2 + $0xf8] sm:$0xff] %v673
    // Predicated region
    $region50: #{tpu_custom_call.1} parent=1 // pred_check
      %p706 = pneg %p86
    $region51: #{tpu_custom_call.1} parent=1 // pred_check_branch
      %708 = sbr.rel (%p706) target = $region53
    $region52: #{tpu_custom_call.1} parent=1 // pred_region
      %v709 = vld [vmem:[#allocation2] sm:$0xff]
      %v710 = vld [vmem:[#allocation2 + $0x8] sm:$0xff]
      %v711 = vld [vmem:[#allocation2 + $0x10] sm:$0xff]
      %v712 = vld [vmem:[#allocation2 + $0x18] sm:$0xff]
      %v713 = vld [vmem:[#allocation2 + $0x20] sm:$0xff]
      %v714 = vld [vmem:[#allocation2 + $0x28] sm:$0xff]
      %v715 = vld [vmem:[#allocation2 + $0x30] sm:$0xff]
      %v716 = vld [vmem:[#allocation2 + $0x38] sm:$0xff]
      %v717 = vld [vmem:[#allocation2 + $0x40] sm:$0xff]
      %v718 = vld [vmem:[#allocation2 + $0x48] sm:$0xff]
      %v719 = vld [vmem:[#allocation2 + $0x50] sm:$0xff]
      %v720 = vld [vmem:[#allocation2 + $0x58] sm:$0xff]
      %v721 = vld [vmem:[#allocation2 + $0x60] sm:$0xff]
      %v722 = vld [vmem:[#allocation2 + $0x68] sm:$0xff]
      %v723 = vld [vmem:[#allocation2 + $0x70] sm:$0xff]
      %v724 = vld [vmem:[#allocation2 + $0x78] sm:$0xff]
      %v725 = vld [vmem:[#allocation2 + $0x80] sm:$0xff]
      %v726 = vld [vmem:[#allocation2 + $0x88] sm:$0xff]
      %v727 = vld [vmem:[#allocation2 + $0x90] sm:$0xff]
      %v728 = vld [vmem:[#allocation2 + $0x98] sm:$0xff]
      %v729 = vld [vmem:[#allocation2 + $0xa0] sm:$0xff]
      %v730 = vld [vmem:[#allocation2 + $0xa8] sm:$0xff]
      %v731 = vld [vmem:[#allocation2 + $0xb0] sm:$0xff]
      %v732 = vld [vmem:[#allocation2 + $0xb8] sm:$0xff]
      %v733 = vld [vmem:[#allocation2 + $0xc0] sm:$0xff]
      %v734 = vld [vmem:[#allocation2 + $0xc8] sm:$0xff]
      %v735 = vld [vmem:[#allocation2 + $0xd0] sm:$0xff]
      %v736 = vld [vmem:[#allocation2 + $0xd8] sm:$0xff]
      %v737 = vld [vmem:[#allocation2 + $0xe0] sm:$0xff]
      %v738 = vld [vmem:[#allocation2 + $0xe8] sm:$0xff]
      %v739 = vld [vmem:[#allocation2 + $0xf0] sm:$0xff]
      %v740 = vld [vmem:[#allocation2 + $0xf8] sm:$0xff]
      %v741 = vmax.f32 %v709, 0.0
      %v742 = vmax.f32 %v710, 0.0
      %v743 = vmax.f32 %v711, 0.0
      %v744 = vmax.f32 %v712, 0.0
      %v745 = vmax.f32 %v713, 0.0
      %v746 = vmax.f32 %v714, 0.0
      %v747 = vmax.f32 %v715, 0.0
      %v748 = vmax.f32 %v716, 0.0
      %v749 = vmax.f32 %v717, 0.0
      %v750 = vmax.f32 %v718, 0.0
      %v751 = vmax.f32 %v719, 0.0
      %v752 = vmax.f32 %v720, 0.0
      %v753 = vmax.f32 %v721, 0.0
      %v754 = vmax.f32 %v722, 0.0
      %v755 = vmax.f32 %v723, 0.0
      %v756 = vmax.f32 %v724, 0.0
      %v757 = vmax.f32 %v725, 0.0
      %v758 = vmax.f32 %v726, 0.0
      %v759 = vmax.f32 %v727, 0.0
      %v760 = vmax.f32 %v728, 0.0
      %v761 = vmax.f32 %v729, 0.0
      %v762 = vmax.f32 %v730, 0.0
      %v763 = vmax.f32 %v731, 0.0
      %v764 = vmax.f32 %v732, 0.0
      %v765 = vmax.f32 %v733, 0.0
      %v766 = vmax.f32 %v734, 0.0
      %v767 = vmax.f32 %v735, 0.0
      %v768 = vmax.f32 %v736, 0.0
      %v769 = vmax.f32 %v737, 0.0
      %v770 = vmax.f32 %v738, 0.0
      %v771 = vmax.f32 %v739, 0.0
      %v772 = vmax.f32 %v740, 0.0
      %v773 = vpack.c.bf16 %v742, %v741
      %v774 = vpack.c.bf16 %v744, %v743
      %v775 = vpack.c.bf16 %v746, %v745
      %v776 = vpack.c.bf16 %v748, %v747
      %v777 = vpack.c.bf16 %v750, %v749
      %v778 = vpack.c.bf16 %v752, %v751
      %v779 = vpack.c.bf16 %v754, %v753
      %v780 = vpack.c.bf16 %v756, %v755
      %v781 = vpack.c.bf16 %v758, %v757
      %v782 = vpack.c.bf16 %v760, %v759
      %v783 = vpack.c.bf16 %v762, %v761
      %v784 = vpack.c.bf16 %v764, %v763
      %v785 = vpack.c.bf16 %v766, %v765
      %v786 = vpack.c.bf16 %v768, %v767
      %v787 = vpack.c.bf16 %v770, %v769
      %v788 = vpack.c.bf16 %v772, %v771
      %v805 = vunpack.c.l.b16 %v773
      %v806 = vunpack.c.h.b16 %v773
      %v807 = vunpack.c.l.b16 %v774
      %v808 = vunpack.c.h.b16 %v774
      %v809 = vunpack.c.l.b16 %v775
      %v810 = vunpack.c.h.b16 %v775
      %v811 = vunpack.c.l.b16 %v776
      %v812 = vunpack.c.h.b16 %v776
      %v813 = vunpack.c.l.b16 %v777
      %v814 = vunpack.c.h.b16 %v777
      %v815 = vunpack.c.l.b16 %v778
      %v816 = vunpack.c.h.b16 %v778
      %v817 = vunpack.c.l.b16 %v779
      %v818 = vunpack.c.h.b16 %v779
      %v819 = vunpack.c.l.b16 %v780
      %v820 = vunpack.c.h.b16 %v780
      %v821 = vunpack.c.l.b16 %v781
      %v822 = vunpack.c.h.b16 %v781
      %v823 = vunpack.c.l.b16 %v782
      %v824 = vunpack.c.h.b16 %v782
      %v825 = vunpack.c.l.b16 %v783
      %v826 = vunpack.c.h.b16 %v783
      %v827 = vunpack.c.l.b16 %v784
      %v828 = vunpack.c.h.b16 %v784
      %v829 = vunpack.c.l.b16 %v785
      %v830 = vunpack.c.h.b16 %v785
      %v831 = vunpack.c.l.b16 %v786
      %v832 = vunpack.c.h.b16 %v786
      %v833 = vunpack.c.l.b16 %v787
      %v834 = vunpack.c.h.b16 %v787
      %v835 = vunpack.c.l.b16 %v788
      %v836 = vunpack.c.h.b16 %v788
      %v837 = vpack.c.b16 %v805, %v805
      %v838 = vpack.c.b16 %v806, %v806
      %v839 = vpack.c.b16 %v807, %v807
      %v840 = vpack.c.b16 %v808, %v808
      %v841 = vpack.c.b16 %v809, %v809
      %v842 = vpack.c.b16 %v810, %v810
      %v843 = vpack.c.b16 %v811, %v811
      %v844 = vpack.c.b16 %v812, %v812
      %v845 = vpack.c.b16 %v813, %v813
      %v846 = vpack.c.b16 %v814, %v814
      %v847 = vpack.c.b16 %v815, %v815
      %v848 = vpack.c.b16 %v816, %v816
      %v849 = vpack.c.b16 %v817, %v817
      %v850 = vpack.c.b16 %v818, %v818
      %v851 = vpack.c.b16 %v819, %v819
      %v852 = vpack.c.b16 %v820, %v820
      %v853 = vpack.c.b16 %v821, %v821
      %v854 = vpack.c.b16 %v822, %v822
      %v855 = vpack.c.b16 %v823, %v823
      %v856 = vpack.c.b16 %v824, %v824
      %v857 = vpack.c.b16 %v825, %v825
      %v858 = vpack.c.b16 %v826, %v826
      %v859 = vpack.c.b16 %v827, %v827
      %v860 = vpack.c.b16 %v828, %v828
      %v861 = vpack.c.b16 %v829, %v829
      %v862 = vpack.c.b16 %v830, %v830
      %v863 = vpack.c.b16 %v831, %v831
      %v864 = vpack.c.b16 %v832, %v832
      %v865 = vpack.c.b16 %v833, %v833
      %v866 = vpack.c.b16 %v834, %v834
      %v867 = vpack.c.b16 %v835, %v835
      %v868 = vpack.c.b16 %v836, %v836
      %901 = vst [vmem:[#allocation11] sm:$0xf] %v837
      %902 = vst [vmem:[#allocation11 + $0x4] sm:$0xf] %v838
      %903 = vst [vmem:[#allocation11 + $0x8] sm:$0xf] %v839
      %904 = vst [vmem:[#allocation11 + $0xc] sm:$0xf] %v840
      %905 = vst [vmem:[#allocation11 + $0x10] sm:$0xf] %v841
      %906 = vst [vmem:[#allocation11 + $0x14] sm:$0xf] %v842
      %907 = vst [vmem:[#allocation11 + $0x18] sm:$0xf] %v843
      %908 = vst [vmem:[#allocation11 + $0x1c] sm:$0xf] %v844
      %909 = vst [vmem:[#allocation11 + $0x20] sm:$0xf] %v845
      %910 = vst [vmem:[#allocation11 + $0x24] sm:$0xf] %v846
      %911 = vst [vmem:[#allocation11 + $0x28] sm:$0xf] %v847
      %912 = vst [vmem:[#allocation11 + $0x2c] sm:$0xf] %v848
      %913 = vst [vmem:[#allocation11 + $0x30] sm:$0xf] %v849
      %914 = vst [vmem:[#allocation11 + $0x34] sm:$0xf] %v850
      %915 = vst [vmem:[#allocation11 + $0x38] sm:$0xf] %v851
      %916 = vst [vmem:[#allocation11 + $0x3c] sm:$0xf] %v852
      %917 = vst [vmem:[#allocation11 + $0x40] sm:$0xf] %v853
      %918 = vst [vmem:[#allocation11 + $0x44] sm:$0xf] %v854
      %919 = vst [vmem:[#allocation11 + $0x48] sm:$0xf] %v855
      %920 = vst [vmem:[#allocation11 + $0x4c] sm:$0xf] %v856
      %921 = vst [vmem:[#allocation11 + $0x50] sm:$0xf] %v857
      %922 = vst [vmem:[#allocation11 + $0x54] sm:$0xf] %v858
      %923 = vst [vmem:[#allocation11 + $0x58] sm:$0xf] %v859
      %924 = vst [vmem:[#allocation11 + $0x5c] sm:$0xf] %v860
      %925 = vst [vmem:[#allocation11 + $0x60] sm:$0xf] %v861
      %926 = vst [vmem:[#allocation11 + $0x64] sm:$0xf] %v862
      %927 = vst [vmem:[#allocation11 + $0x68] sm:$0xf] %v863
      %928 = vst [vmem:[#allocation11 + $0x6c] sm:$0xf] %v864
      %929 = vst [vmem:[#allocation11 + $0x70] sm:$0xf] %v865
      %930 = vst [vmem:[#allocation11 + $0x74] sm:$0xf] %v866
      %931 = vst [vmem:[#allocation11 + $0x78] sm:$0xf] %v867
      %932 = vst [vmem:[#allocation11 + $0x7c] sm:$0xf] %v868
      %v933 = vld [vmem:[#allocation8] sm:$0xf]
      %v934 = vld [vmem:[#allocation8 + $0x4] sm:$0xf]
      %v935 = vld [vmem:[#allocation8 + $0x8] sm:$0xf]
      %v936 = vld [vmem:[#allocation8 + $0xc] sm:$0xf]
      %v937 = vld [vmem:[#allocation8 + $0x10] sm:$0xf]
      %v938 = vld [vmem:[#allocation8 + $0x14] sm:$0xf]
      %v939 = vld [vmem:[#allocation8 + $0x18] sm:$0xf]
      %v940 = vld [vmem:[#allocation8 + $0x1c] sm:$0xf]
      %v941 = vld [vmem:[#allocation8 + $0x20] sm:$0xf]
      %v942 = vld [vmem:[#allocation8 + $0x24] sm:$0xf]
      %v943 = vld [vmem:[#allocation8 + $0x28] sm:$0xf]
      %v944 = vld [vmem:[#allocation8 + $0x2c] sm:$0xf]
      %v945 = vld [vmem:[#allocation8 + $0x30] sm:$0xf]
      %v946 = vld [vmem:[#allocation8 + $0x34] sm:$0xf]
      %v947 = vld [vmem:[#allocation8 + $0x38] sm:$0xf]
      %v948 = vld [vmem:[#allocation8 + $0x3c] sm:$0xf]
      %v949 = vld [vmem:[%s4] sm:$0x1]
      %v951 = vlaneseq
      %v952 = vshrl.u32 %v951, 7
      %v953 = vsub.s32 0, %v952
      %v954 = vrot.slane %v949, %v953
      %v972 = vunpack.c.l.b16 %v933
      %v973 = vunpack.c.l.b16 %v934
      %v974 = vunpack.c.l.b16 %v935
      %v975 = vunpack.c.l.b16 %v936
      %v976 = vunpack.c.l.b16 %v937
      %v977 = vunpack.c.l.b16 %v938
      %v978 = vunpack.c.l.b16 %v939
      %v979 = vunpack.c.l.b16 %v940
      %v980 = vunpack.c.l.b16 %v941
      %v981 = vunpack.c.l.b16 %v942
      %v982 = vunpack.c.l.b16 %v943
      %v983 = vunpack.c.l.b16 %v944
      %v984 = vunpack.c.l.b16 %v945
      %v985 = vunpack.c.l.b16 %v946
      %v986 = vunpack.c.l.b16 %v947
      %v987 = vunpack.c.l.b16 %v948
      %v988 = vpack.c.b16 %v973, %v972
      %v989 = vpack.c.b16 %v975, %v974
      %v990 = vpack.c.b16 %v977, %v976
      %v991 = vpack.c.b16 %v979, %v978
      %v992 = vpack.c.b16 %v981, %v980
      %v993 = vpack.c.b16 %v983, %v982
      %v994 = vpack.c.b16 %v985, %v984
      %v995 = vpack.c.b16 %v987, %v986
      %1004 = vmatprep.subr.bf16.mxu0 0
      %1005 = vmatpush1.bf16.msra.mxu0 %v988
      %1006 = vmatprep.subr.bf16.mxu0 0
      %1007 = vmatpush1.bf16.msra.mxu0 %v989
      %1008 = vmatprep.subr.bf16.mxu0 0
      %1009 = vmatpush1.bf16.msra.mxu0 %v990
      %1010 = vmatprep.subr.bf16.mxu0 0
      %1011 = vmatpush1.bf16.msra.mxu0 %v991
      %1012 = vmatprep.subr.bf16.mxu0 0
      %1013 = vmatpush1.bf16.msra.mxu0 %v992
      %1014 = vmatprep.subr.bf16.mxu0 0
      %1015 = vmatpush1.bf16.msra.mxu0 %v993
      %1016 = vmatprep.subr.bf16.mxu0 0
      %1017 = vmatpush1.bf16.msra.mxu0 %v994
      %1018 = vmatprep.subr.bf16.mxu0 0
      %1019 = vmatpush1.bf16.msra.mxu0 %v995
      %1020 = vmatprep.subr.bf16.mxu0 0
      %1021 = vmatpush1.bf16.msra.mxu0 0
      %1022 = vmatprep.subr.bf16.mxu0 0
      %1023 = vmatpush1.bf16.msra.mxu0 0
      %1024 = vmatprep.subr.bf16.mxu0 0
      %1025 = vmatpush1.bf16.msra.mxu0 0
      %1026 = vmatprep.subr.bf16.mxu0 0
      %1027 = vmatpush1.bf16.msra.mxu0 0
      %1028 = vmatprep.subr.bf16.mxu0 0
      %1029 = vmatpush1.bf16.msra.mxu0 0
      %1030 = vmatprep.subr.bf16.mxu0 0
      %1031 = vmatpush1.bf16.msra.mxu0 0
      %1032 = vmatprep.subr.bf16.mxu0 0
      %1033 = vmatpush1.bf16.msra.mxu0 0
      %1034 = vmatprep.subr.bf16.mxu0 0
      %1035 = vmatpush1.bf16.msra.mxu0 0
      %1036 = vmatprep.mubr.bf16.mxu0 0
      %1037 = vmatmul.mubr.bf16.gmra.mrb[0].mxu0 %v773
      %v1038 = vpop.f32.mrb[0].mxu0
      %v1039 = vadd.f32 %v954, %v1038
      %v1040 = vpop.f32.mrb[0].mxu0
      %v1041 = vpop.f32.mrb[0].mxu0
      %v1042 = vadd.f32 %v954, %v1041
      %v1043 = vpop.f32.mrb[0].mxu0
      %1044 = vmatprep.mubr.bf16.mxu0 0
      %1045 = vmatmul.mubr.bf16.gmra.mrb[0].mxu0 %v774
      %v1046 = vpop.f32.mrb[0].mxu0
      %v1047 = vadd.f32 %v954, %v1046
      %v1048 = vpop.f32.mrb[0].mxu0
      %v1049 = vpop.f32.mrb[0].mxu0
      %v1050 = vadd.f32 %v954, %v1049
      %v1051 = vpop.f32.mrb[0].mxu0
      %1052 = vmatprep.mubr.bf16.mxu0 0
      %1053 = vmatmul.mubr.bf16.gmra.mrb[0].mxu0 %v775
      %v1054 = vpop.f32.mrb[0].mxu0
      %v1055 = vadd.f32 %v954, %v1054
      %v1056 = vpop.f32.mrb[0].mxu0
      %v1057 = vpop.f32.mrb[0].mxu0
      %v1058 = vadd.f32 %v954, %v1057
      %v1059 = vpop.f32.mrb[0].mxu0
      %1060 = vmatprep.mubr.bf16.mxu0 0
      %1061 = vmatmul.mubr.bf16.gmra.mrb[0].mxu0 %v776
      %v1062 = vpop.f32.mrb[0].mxu0
      %v1063 = vadd.f32 %v954, %v1062
      %v1064 = vpop.f32.mrb[0].mxu0
      %v1065 = vpop.f32.mrb[0].mxu0
      %v1066 = vadd.f32 %v954, %v1065
      %v1067 = vpop.f32.mrb[0].mxu0
      %1068 = vmatprep.mubr.bf16.mxu0 0
      %1069 = vmatmul.mubr.bf16.gmra.mrb[0].mxu0 %v777
      %v1070 = vpop.f32.mrb[0].mxu0
      %v1071 = vadd.f32 %v954, %v1070
      %v1072 = vpop.f32.mrb[0].mxu0
      %v1073 = vpop.f32.mrb[0].mxu0
      %v1074 = vadd.f32 %v954, %v1073
      %v1075 = vpop.f32.mrb[0].mxu0
      %1076 = vmatprep.mubr.bf16.mxu0 0
      %1077 = vmatmul.mubr.bf16.gmra.mrb[0].mxu0 %v778
      %v1078 = vpop.f32.mrb[0].mxu0
      %v1079 = vadd.f32 %v954, %v1078
      %v1080 = vpop.f32.mrb[0].mxu0
      %v1081 = vpop.f32.mrb[0].mxu0
      %v1082 = vadd.f32 %v954, %v1081
      %v1083 = vpop.f32.mrb[0].mxu0
      %1084 = vmatprep.mubr.bf16.mxu0 0
      %1085 = vmatmul.mubr.bf16.gmra.mrb[0].mxu0 %v779
      %v1086 = vpop.f32.mrb[0].mxu0
      %v1087 = vadd.f32 %v954, %v1086
      %v1088 = vpop.f32.mrb[0].mxu0
      %v1089 = vpop.f32.mrb[0].mxu0
      %v1090 = vadd.f32 %v954, %v1089
      %v1091 = vpop.f32.mrb[0].mxu0
      %1092 = vmatprep.mubr.bf16.mxu0 0
      %1093 = vmatmul.mubr.bf16.gmra.mrb[0].mxu0 %v780
      %v1094 = vpop.f32.mrb[0].mxu0
      %v1095 = vadd.f32 %v954, %v1094
      %v1096 = vpop.f32.mrb[0].mxu0
      %v1097 = vpop.f32.mrb[0].mxu0
      %v1098 = vadd.f32 %v954, %v1097
      %v1099 = vpop.f32.mrb[0].mxu0
      %1100 = vmatprep.mubr.bf16.mxu0 0
      %1101 = vmatmul.mubr.bf16.gmra.mrb[0].mxu0 %v781
      %v1102 = vpop.f32.mrb[0].mxu0
      %v1103 = vadd.f32 %v954, %v1102
      %v1104 = vpop.f32.mrb[0].mxu0
      %v1105 = vpop.f32.mrb[0].mxu0
      %v1106 = vadd.f32 %v954, %v1105
      %v1107 = vpop.f32.mrb[0].mxu0
      %1108 = vmatprep.mubr.bf16.mxu0 0
      %1109 = vmatmul.mubr.bf16.gmra.mrb[0].mxu0 %v782
      %v1110 = vpop.f32.mrb[0].mxu0
      %v1111 = vadd.f32 %v954, %v1110
      %v1112 = vpop.f32.mrb[0].mxu0
      %v1113 = vpop.f32.mrb[0].mxu0
      %v1114 = vadd.f32 %v954, %v1113
      %v1115 = vpop.f32.mrb[0].mxu0
      %1116 = vmatprep.mubr.bf16.mxu0 0
      %1117 = vmatmul.mubr.bf16.gmra.mrb[0].mxu0 %v783
      %v1118 = vpop.f32.mrb[0].mxu0
      %v1119 = vadd.f32 %v954, %v1118
      %v1120 = vpop.f32.mrb[0].mxu0
      %v1121 = vpop.f32.mrb[0].mxu0
      %v1122 = vadd.f32 %v954, %v1121
      %v1123 = vpop.f32.mrb[0].mxu0
      %1124 = vmatprep.mubr.bf16.mxu0 0
      %1125 = vmatmul.mubr.bf16.gmra.mrb[0].mxu0 %v784
      %v1126 = vpop.f32.mrb[0].mxu0
      %v1127 = vadd.f32 %v954, %v1126
      %v1128 = vpop.f32.mrb[0].mxu0
      %v1129 = vpop.f32.mrb[0].mxu0
      %v1130 = vadd.f32 %v954, %v1129
      %v1131 = vpop.f32.mrb[0].mxu0
      %1132 = vmatprep.mubr.bf16.mxu0 0
      %1133 = vmatmul.mubr.bf16.gmra.mrb[0].mxu0 %v785
      %v1134 = vpop.f32.mrb[0].mxu0
      %v1135 = vadd.f32 %v954, %v1134
      %v1136 = vpop.f32.mrb[0].mxu0
      %v1137 = vpop.f32.mrb[0].mxu0
      %v1138 = vadd.f32 %v954, %v1137
      %v1139 = vpop.f32.mrb[0].mxu0
      %1140 = vmatprep.mubr.bf16.mxu0 0
      %1141 = vmatmul.mubr.bf16.gmra.mrb[0].mxu0 %v786
      %v1142 = vpop.f32.mrb[0].mxu0
      %v1143 = vadd.f32 %v954, %v1142
      %v1144 = vpop.f32.mrb[0].mxu0
      %v1145 = vpop.f32.mrb[0].mxu0
      %v1146 = vadd.f32 %v954, %v1145
      %v1147 = vpop.f32.mrb[0].mxu0
      %1148 = vmatprep.mubr.bf16.mxu0 0
      %1149 = vmatmul.mubr.bf16.gmra.mrb[0].mxu0 %v787
      %v1150 = vpop.f32.mrb[0].mxu0
      %v1151 = vadd.f32 %v954, %v1150
      %v1152 = vpop.f32.mrb[0].mxu0
      %v1153 = vpop.f32.mrb[0].mxu0
      %v1154 = vadd.f32 %v954, %v1153
      %v1155 = vpop.f32.mrb[0].mxu0
      %1156 = vmatprep.mubr.bf16.mxu0 0
      %1157 = vmatmul.mubr.bf16.gmra.mrb[0].mxu0 %v788
      %v1158 = vpop.f32.mrb[0].mxu0
      %v1159 = vadd.f32 %v954, %v1158
      %v1160 = vpop.f32.mrb[0].mxu0
      %v1161 = vpop.f32.mrb[0].mxu0
      %v1162 = vadd.f32 %v954, %v1161
      %v1163 = vpop.f32.mrb[0].mxu0
      %1164 = vdwg.mxu0
      %v1165 = vmax.f32 %v1039, 0.0
      %v1166 = vmax.f32 %v1042, 0.0
      %v1167 = vmax.f32 %v1047, 0.0
      %v1168 = vmax.f32 %v1050, 0.0
      %v1169 = vmax.f32 %v1055, 0.0
      %v1170 = vmax.f32 %v1058, 0.0
      %v1171 = vmax.f32 %v1063, 0.0
      %v1172 = vmax.f32 %v1066, 0.0
      %v1173 = vmax.f32 %v1071, 0.0
      %v1174 = vmax.f32 %v1074, 0.0
      %v1175 = vmax.f32 %v1079, 0.0
      %v1176 = vmax.f32 %v1082, 0.0
      %v1177 = vmax.f32 %v1087, 0.0
      %v1178 = vmax.f32 %v1090, 0.0
      %v1179 = vmax.f32 %v1095, 0.0
      %v1180 = vmax.f32 %v1098, 0.0
      %v1181 = vmax.f32 %v1103, 0.0
      %v1182 = vmax.f32 %v1106, 0.0
      %v1183 = vmax.f32 %v1111, 0.0
      %v1184 = vmax.f32 %v1114, 0.0
      %v1185 = vmax.f32 %v1119, 0.0
      %v1186 = vmax.f32 %v1122, 0.0
      %v1187 = vmax.f32 %v1127, 0.0
      %v1188 = vmax.f32 %v1130, 0.0
      %v1189 = vmax.f32 %v1135, 0.0
      %v1190 = vmax.f32 %v1138, 0.0
      %v1191 = vmax.f32 %v1143, 0.0
      %v1192 = vmax.f32 %v1146, 0.0
      %v1193 = vmax.f32 %v1151, 0.0
      %v1194 = vmax.f32 %v1154, 0.0
      %v1195 = vmax.f32 %v1159, 0.0
      %v1196 = vmax.f32 %v1162, 0.0
      %v1197 = vpack.c.bf16 %v1166, %v1165
      %v1198 = vpack.c.bf16 %v1168, %v1167
      %v1199 = vpack.c.bf16 %v1170, %v1169
      %v1200 = vpack.c.bf16 %v1172, %v1171
      %v1201 = vpack.c.bf16 %v1174, %v1173
      %v1202 = vpack.c.bf16 %v1176, %v1175
      %v1203 = vpack.c.bf16 %v1178, %v1177
      %v1204 = vpack.c.bf16 %v1180, %v1179
      %v1205 = vpack.c.bf16 %v1182, %v1181
      %v1206 = vpack.c.bf16 %v1184, %v1183
      %v1207 = vpack.c.bf16 %v1186, %v1185
      %v1208 = vpack.c.bf16 %v1188, %v1187
      %v1209 = vpack.c.bf16 %v1190, %v1189
      %v1210 = vpack.c.bf16 %v1192, %v1191
      %v1211 = vpack.c.bf16 %v1194, %v1193
      %v1212 = vpack.c.bf16 %v1196, %v1195
      %v1213 = vld [vmem:[#allocation9] sm:$0xf]
      %v1214 = vld [vmem:[#allocation9 + $0x4] sm:$0xf]
      %v1215 = vld [vmem:[#allocation9 + $0x8] sm:$0xf]
      %v1216 = vld [vmem:[#allocation9 + $0xc] sm:$0xf]
      %v1217 = vld [vmem:[#allocation9 + $0x10] sm:$0xf]
      %v1218 = vld [vmem:[#allocation9 + $0x14] sm:$0xf]
      %v1219 = vld [vmem:[#allocation9 + $0x18] sm:$0xf]
      %v1220 = vld [vmem:[#allocation9 + $0x1c] sm:$0xf]
      %v1221 = vld [vmem:[#allocation9 + $0x20] sm:$0xf]
      %v1222 = vld [vmem:[#allocation9 + $0x24] sm:$0xf]
      %v1223 = vld [vmem:[#allocation9 + $0x28] sm:$0xf]
      %v1224 = vld [vmem:[#allocation9 + $0x2c] sm:$0xf]
      %v1225 = vld [vmem:[#allocation9 + $0x30] sm:$0xf]
      %v1226 = vld [vmem:[#allocation9 + $0x34] sm:$0xf]
      %v1227 = vld [vmem:[#allocation9 + $0x38] sm:$0xf]
      %v1228 = vld [vmem:[#allocation9 + $0x3c] sm:$0xf]
      %v1229 = vld [vmem:[%s6] sm:$0x1]
      %v1231 = vlaneseq
      %v1232 = vshrl.u32 %v1231, 7
      %v1233 = vsub.s32 0, %v1232
      %v1234 = vrot.slane %v1229, %v1233
      %v1252 = vunpack.c.l.b16 %v1213
      %v1253 = vunpack.c.l.b16 %v1214
      %v1254 = vunpack.c.l.b16 %v1215
      %v1255 = vunpack.c.l.b16 %v1216
      %v1256 = vunpack.c.l.b16 %v1217
      %v1257 = vunpack.c.l.b16 %v1218
      %v1258 = vunpack.c.l.b16 %v1219
      %v1259 = vunpack.c.l.b16 %v1220
      %v1260 = vunpack.c.l.b16 %v1221
      %v1261 = vunpack.c.l.b16 %v1222
      %v1262 = vunpack.c.l.b16 %v1223
      %v1263 = vunpack.c.l.b16 %v1224
      %v1264 = vunpack.c.l.b16 %v1225
      %v1265 = vunpack.c.l.b16 %v1226
      %v1266 = vunpack.c.l.b16 %v1227
      %v1267 = vunpack.c.l.b16 %v1228
      %v1268 = vpack.c.b16 %v1253, %v1252
      %v1269 = vpack.c.b16 %v1255, %v1254
      %v1270 = vpack.c.b16 %v1257, %v1256
      %v1271 = vpack.c.b16 %v1259, %v1258
      %v1272 = vpack.c.b16 %v1261, %v1260
      %v1273 = vpack.c.b16 %v1263, %v1262
      %v1274 = vpack.c.b16 %v1265, %v1264
      %v1275 = vpack.c.b16 %v1267, %v1266
      %1284 = vmatprep.subr.bf16.mxu0 0
      %1285 = vmatpush1.bf16.msra.mxu0 %v1268
      %1286 = vmatprep.subr.bf16.mxu0 0
      %1287 = vmatpush1.bf16.msra.mxu0 %v1269
      %1288 = vmatprep.subr.bf16.mxu0 0
      %1289 = vmatpush1.bf16.msra.mxu0 %v1270
      %1290 = vmatprep.subr.bf16.mxu0 0
      %1291 = vmatpush1.bf16.msra.mxu0 %v1271
      %1292 = vmatprep.subr.bf16.mxu0 0
      %1293 = vmatpush1.bf16.msra.mxu0 %v1272
      %1294 = vmatprep.subr.bf16.mxu0 0
      %1295 = vmatpush1.bf16.msra.mxu0 %v1273
      %1296 = vmatprep.subr.bf16.mxu0 0
      %1297 = vmatpush1.bf16.msra.mxu0 %v1274
      %1298 = vmatprep.subr.bf16.mxu0 0
      %1299 = vmatpush1.bf16.msra.mxu0 %v1275
      %1300 = vmatprep.subr.bf16.mxu0 0
      %1301 = vmatpush1.bf16.msra.mxu0 0
      %1302 = vmatprep.subr.bf16.mxu0 0
      %1303 = vmatpush1.bf16.msra.mxu0 0
      %1304 = vmatprep.subr.bf16.mxu0 0
      %1305 = vmatpush1.bf16.msra.mxu0 0
      %1306 = vmatprep.subr.bf16.mxu0 0
      %1307 = vmatpush1.bf16.msra.mxu0 0
      %1308 = vmatprep.subr.bf16.mxu0 0
      %1309 = vmatpush1.bf16.msra.mxu0 0
      %1310 = vmatprep.subr.bf16.mxu0 0
      %1311 = vmatpush1.bf16.msra.mxu0 0
      %1312 = vmatprep.subr.bf16.mxu0 0
      %1313 = vmatpush1.bf16.msra.mxu0 0
      %1314 = vmatprep.subr.bf16.mxu0 0
      %1315 = vmatpush1.bf16.msra.mxu0 0
      %1316 = vmatprep.mubr.bf16.mxu0 0
      %1317 = vmatmul.mubr.bf16.gmra.mrb[0].mxu0 %v1197
      %v1318 = vpop.f32.mrb[0].mxu0
      %v1319 = vadd.f32 %v1234, %v1318
      %v1320 = vpop.f32.mrb[0].mxu0
      %v1321 = vpop.f32.mrb[0].mxu0
      %v1322 = vadd.f32 %v1234, %v1321
      %v1323 = vpop.f32.mrb[0].mxu0
      %1324 = vmatprep.mubr.bf16.mxu0 0
      %1325 = vmatmul.mubr.bf16.gmra.mrb[0].mxu0 %v1198
      %v1326 = vpop.f32.mrb[0].mxu0
      %v1327 = vadd.f32 %v1234, %v1326
      %v1328 = vpop.f32.mrb[0].mxu0
      %v1329 = vpop.f32.mrb[0].mxu0
      %v1330 = vadd.f32 %v1234, %v1329
      %v1331 = vpop.f32.mrb[0].mxu0
      %1332 = vmatprep.mubr.bf16.mxu0 0
      %1333 = vmatmul.mubr.bf16.gmra.mrb[0].mxu0 %v1199
      %v1334 = vpop.f32.mrb[0].mxu0
      %v1335 = vadd.f32 %v1234, %v1334
      %v1336 = vpop.f32.mrb[0].mxu0
      %v1337 = vpop.f32.mrb[0].mxu0
      %v1338 = vadd.f32 %v1234, %v1337
      %v1339 = vpop.f32.mrb[0].mxu0
      %1340 = vmatprep.mubr.bf16.mxu0 0
      %1341 = vmatmul.mubr.bf16.gmra.mrb[0].mxu0 %v1200
      %v1342 = vpop.f32.mrb[0].mxu0
      %v1343 = vadd.f32 %v1234, %v1342
      %v1344 = vpop.f32.mrb[0].mxu0
      %v1345 = vpop.f32.mrb[0].mxu0
      %v1346 = vadd.f32 %v1234, %v1345
      %v1347 = vpop.f32.mrb[0].mxu0
      %1348 = vmatprep.mubr.bf16.mxu0 0
      %1349 = vmatmul.mubr.bf16.gmra.mrb[0].mxu0 %v1201
      %v1350 = vpop.f32.mrb[0].mxu0
      %v1351 = vadd.f32 %v1234, %v1350
      %v1352 = vpop.f32.mrb[0].mxu0
      %v1353 = vpop.f32.mrb[0].mxu0
      %v1354 = vadd.f32 %v1234, %v1353
      %v1355 = vpop.f32.mrb[0].mxu0
      %1356 = vmatprep.mubr.bf16.mxu0 0
      %1357 = vmatmul.mubr.bf16.gmra.mrb[0].mxu0 %v1202
      %v1358 = vpop.f32.mrb[0].mxu0
      %v1359 = vadd.f32 %v1234, %v1358
      %v1360 = vpop.f32.mrb[0].mxu0
      %v1361 = vpop.f32.mrb[0].mxu0
      %v1362 = vadd.f32 %v1234, %v1361
      %v1363 = vpop.f32.mrb[0].mxu0
      %1364 = vmatprep.mubr.bf16.mxu0 0
      %1365 = vmatmul.mubr.bf16.gmra.mrb[0].mxu0 %v1203
      %v1366 = vpop.f32.mrb[0].mxu0
      %v1367 = vadd.f32 %v1234, %v1366
      %v1368 = vpop.f32.mrb[0].mxu0
      %v1369 = vpop.f32.mrb[0].mxu0
      %v1370 = vadd.f32 %v1234, %v1369
      %v1371 = vpop.f32.mrb[0].mxu0
      %1372 = vmatprep.mubr.bf16.mxu0 0
      %1373 = vmatmul.mubr.bf16.gmra.mrb[0].mxu0 %v1204
      %v1374 = vpop.f32.mrb[0].mxu0
      %v1375 = vadd.f32 %v1234, %v1374
      %v1376 = vpop.f32.mrb[0].mxu0
      %v1377 = vpop.f32.mrb[0].mxu0
      %v1378 = vadd.f32 %v1234, %v1377
      %v1379 = vpop.f32.mrb[0].mxu0
      %1380 = vmatprep.mubr.bf16.mxu0 0
      %1381 = vmatmul.mubr.bf16.gmra.mrb[0].mxu0 %v1205
      %v1382 = vpop.f32.mrb[0].mxu0
      %v1383 = vadd.f32 %v1234, %v1382
      %v1384 = vpop.f32.mrb[0].mxu0
      %v1385 = vpop.f32.mrb[0].mxu0
      %v1386 = vadd.f32 %v1234, %v1385
      %v1387 = vpop.f32.mrb[0].mxu0
      %1388 = vmatprep.mubr.bf16.mxu0 0
      %1389 = vmatmul.mubr.bf16.gmra.mrb[0].mxu0 %v1206
      %v1390 = vpop.f32.mrb[0].mxu0
      %v1391 = vadd.f32 %v1234, %v1390
      %v1392 = vpop.f32.mrb[0].mxu0
      %v1393 = vpop.f32.mrb[0].mxu0
      %v1394 = vadd.f32 %v1234, %v1393
      %v1395 = vpop.f32.mrb[0].mxu0
      %1396 = vmatprep.mubr.bf16.mxu0 0
      %1397 = vmatmul.mubr.bf16.gmra.mrb[0].mxu0 %v1207
      %v1398 = vpop.f32.mrb[0].mxu0
      %v1399 = vadd.f32 %v1234, %v1398
      %v1400 = vpop.f32.mrb[0].mxu0
      %v1401 = vpop.f32.mrb[0].mxu0
      %v1402 = vadd.f32 %v1234, %v1401
      %v1403 = vpop.f32.mrb[0].mxu0
      %1404 = vmatprep.mubr.bf16.mxu0 0
      %1405 = vmatmul.mubr.bf16.gmra.mrb[0].mxu0 %v1208
      %v1406 = vpop.f32.mrb[0].mxu0
      %v1407 = vadd.f32 %v1234, %v1406
      %v1408 = vpop.f32.mrb[0].mxu0
      %v1409 = vpop.f32.mrb[0].mxu0
      %v1410 = vadd.f32 %v1234, %v1409
      %v1411 = vpop.f32.mrb[0].mxu0
      %1412 = vmatprep.mubr.bf16.mxu0 0
      %1413 = vmatmul.mubr.bf16.gmra.mrb[0].mxu0 %v1209
      %v1414 = vpop.f32.mrb[0].mxu0
      %v1415 = vadd.f32 %v1234, %v1414
      %v1416 = vpop.f32.mrb[0].mxu0
      %v1417 = vpop.f32.mrb[0].mxu0
      %v1418 = vadd.f32 %v1234, %v1417
      %v1419 = vpop.f32.mrb[0].mxu0
      %1420 = vmatprep.mubr.bf16.mxu0 0
      %1421 = vmatmul.mubr.bf16.gmra.mrb[0].mxu0 %v1210
      %v1422 = vpop.f32.mrb[0].mxu0
      %v1423 = vadd.f32 %v1234, %v1422
      %v1424 = vpop.f32.mrb[0].mxu0
      %v1425 = vpop.f32.mrb[0].mxu0
      %v1426 = vadd.f32 %v1234, %v1425
      %v1427 = vpop.f32.mrb[0].mxu0
      %1428 = vmatprep.mubr.bf16.mxu0 0
      %1429 = vmatmul.mubr.bf16.gmra.mrb[0].mxu0 %v1211
      %v1430 = vpop.f32.mrb[0].mxu0
      %v1431 = vadd.f32 %v1234, %v1430
      %v1432 = vpop.f32.mrb[0].mxu0
      %v1433 = vpop.f32.mrb[0].mxu0
      %v1434 = vadd.f32 %v1234, %v1433
      %v1435 = vpop.f32.mrb[0].mxu0
      %1436 = vmatprep.mubr.bf16.mxu0 0
      %1437 = vmatmul.mubr.bf16.gmra.mrb[0].mxu0 %v1212
      %v1438 = vpop.f32.mrb[0].mxu0
      %v1439 = vadd.f32 %v1234, %v1438
      %v1440 = vpop.f32.mrb[0].mxu0
      %v1441 = vpop.f32.mrb[0].mxu0
      %v1442 = vadd.f32 %v1234, %v1441
      %v1443 = vpop.f32.mrb[0].mxu0
      %1444 = vdwg.mxu0
      %1445 = vst [vmem:[#allocation12] sm:$0xff] %v1319
      %1446 = vst [vmem:[#allocation12 + $0x8] sm:$0xff] %v1322
      %1447 = vst [vmem:[#allocation12 + $0x10] sm:$0xff] %v1327
      %1448 = vst [vmem:[#allocation12 + $0x18] sm:$0xff] %v1330
      %1449 = vst [vmem:[#allocation12 + $0x20] sm:$0xff] %v1335
      %1450 = vst [vmem:[#allocation12 + $0x28] sm:$0xff] %v1338
      %1451 = vst [vmem:[#allocation12 + $0x30] sm:$0xff] %v1343
      %1452 = vst [vmem:[#allocation12 + $0x38] sm:$0xff] %v1346
      %1453 = vst [vmem:[#allocation12 + $0x40] sm:$0xff] %v1351
      %1454 = vst [vmem:[#allocation12 + $0x48] sm:$0xff] %v1354
      %1455 = vst [vmem:[#allocation12 + $0x50] sm:$0xff] %v1359
      %1456 = vst [vmem:[#allocation12 + $0x58] sm:$0xff] %v1362
      %1457 = vst [vmem:[#allocation12 + $0x60] sm:$0xff] %v1367
      %1458 = vst [vmem:[#allocation12 + $0x68] sm:$0xff] %v1370
      %1459 = vst [vmem:[#allocation12 + $0x70] sm:$0xff] %v1375
      %1460 = vst [vmem:[#allocation12 + $0x78] sm:$0xff] %v1378
      %1461 = vst [vmem:[#allocation12 + $0x80] sm:$0xff] %v1383
      %1462 = vst [vmem:[#allocation12 + $0x88] sm:$0xff] %v1386
      %1463 = vst [vmem:[#allocation12 + $0x90] sm:$0xff] %v1391
      %1464 = vst [vmem:[#allocation12 + $0x98] sm:$0xff] %v1394
      %1465 = vst [vmem:[#allocation12 + $0xa0] sm:$0xff] %v1399
      %1466 = vst [vmem:[#allocation12 + $0xa8] sm:$0xff] %v1402
      %1467 = vst [vmem:[#allocation12 + $0xb0] sm:$0xff] %v1407
      %1468 = vst [vmem:[#allocation12 + $0xb8] sm:$0xff] %v1410
      %1469 = vst [vmem:[#allocation12 + $0xc0] sm:$0xff] %v1415
      %1470 = vst [vmem:[#allocation12 + $0xc8] sm:$0xff] %v1418
      %1471 = vst [vmem:[#allocation12 + $0xd0] sm:$0xff] %v1423
      %1472 = vst [vmem:[#allocation12 + $0xd8] sm:$0xff] %v1426
      %1473 = vst [vmem:[#allocation12 + $0xe0] sm:$0xff] %v1431
      %1474 = vst [vmem:[#allocation12 + $0xe8] sm:$0xff] %v1434
      %1475 = vst [vmem:[#allocation12 + $0xf0] sm:$0xff] %v1439
      %1476 = vst [vmem:[#allocation12 + $0xf8] sm:$0xff] %v1442
    $region53: #{tpu_custom_call.1} parent=1 // pred_fallthru
      _
    // Predicated region
    $region54: #{tpu_custom_call.1} parent=1 // pred_check
      _
    $region55: #{tpu_custom_call.1} parent=1 // pred_check_branch
      %1478 = sbr.rel (0) target = $region57
    $region56: #{tpu_custom_call.1} parent=1 // pred_region
      %s1480 = ssub.s32 2048, 2048
      %1481 = vsyncadd [#allocation5], %s1480
      %s1482 = sshll.u32 [#allocation11], 4
      %s1483 = int_to_ptr.vmem [resolvable:$true] %s1482
      %1488 = dma.vmem_to_hbm [thread:$0]  %s1483, 2048, %s7, [#allocation5], 64, 64, 4
    $region57: #{tpu_custom_call.1} parent=1 // pred_fallthru
      _
    // Predicated region
    $region58: #{tpu_custom_call.1} parent=1 // pred_check
      _
    $region59: #{tpu_custom_call.1} parent=1 // pred_check_branch
      %1490 = sbr.rel (0) target = $region61
    $region60: #{tpu_custom_call.1} parent=1 // pred_region
      %s1492 = ssub.s32 4096, 4096
      %1493 = vsyncadd [#allocation13], %s1492
      %s1494 = sshll.u32 [#allocation12], 4
      %s1495 = int_to_ptr.vmem [resolvable:$true] %s1494
      %1500 = dma.vmem_to_hbm [thread:$0]  %s1495, 4096, %s8, [#allocation13], 128, 128, 8
    $region61: #{tpu_custom_call.1} parent=1 // pred_fallthru
      _
    // Predicated region
    $region62: #{tpu_custom_call.1} parent=1 // pred_check
      _
    $region63: #{tpu_custom_call.1} parent=1 // pred_check_branch
      %1502 = sbr.rel (0) target = $region65
    $region64: #{tpu_custom_call.1} parent=1 // pred_region
      %1503 = dma.done [#allocation5], 2048
    $region65: #{tpu_custom_call.1} parent=1 // pred_fallthru
      _
    // Predicated region
    $region66: #{tpu_custom_call.1} parent=1 // pred_check
      _
    $region67: #{tpu_custom_call.1} parent=1 // pred_check_branch
      %1505 = sbr.rel (0) target = $region69
    $region68: #{tpu_custom_call.1} parent=1 // pred_region
      %1506 = dma.done [#allocation13], 4096
    $region69: #{tpu_custom_call.1} parent=1 // pred_fallthru
      _
    %1507 = vsyncpa [#allocation4], 1
    %1508 = vsyncpa [#allocation7], 1
    %1509 = vsyncpa [#allocation10], 1
    %1510 = vsyncpa [#allocation5], 1
    %1511 = vsyncpa [#allocation13], 1

</llo_original>
